<compile_context>
chip_gen: v7x
topology: tpu7x:2x2x1
jax: 0.10.0
libtpu: 0.0.40
codegen_flags: <defaults>
</compile_context>

<pallas_src>
import functools

import jax
import jax.numpy as jnp
from jax.experimental import pallas as pl
from jax.experimental.pallas import tpu as pltpu


def meta_kernel(sup_ref, que_ref, out_ref, *,
                num_shots, n_sup, n_que, beta, margin, inv_count, eps):
    """Blocks: sup (D, 2*n_sup, Bt), que (D, 2*n_que, Bt), out (n_que, Bt).
    Leading axis = embed dim D, sublanes = triples-per-task, lanes = tasks.
    Rows [0:n) are heads, rows [n:2n) are tails."""
    sup = sup_ref[...].astype(jnp.float32)               # (D, 2*n_sup, Bt)
    hs = sup[:, :n_sup, :]                                # (D, n_sup, Bt)
    ts = sup[:, n_sup:, :]

    # ---- relation prototype (stand-in for relation_meta_learner) -----------
    r_meta = jnp.mean(ts[:, :num_shots, :] - hs[:, :num_shots, :],
                      axis=1, keepdims=True)              # (D, 1, Bt)

    # ---- EmbeddingLearner on support: score = -||h + r - t||_2 -------------
    diff_s = hs + r_meta - ts                             # (D, n_sup, Bt)
    ssq_s = jnp.sum(diff_s * diff_s, axis=0)              # (n_sup, Bt)  leading-axis VPU adds
    inv_norm_s = jax.lax.rsqrt(ssq_s + eps)               # EUP, eps-guarded
    norm_s = ssq_s * inv_norm_s                           # ~= sqrt(ssq_s)
    score_p = -norm_s[:num_shots, :]                      # (num_shots, Bt)
    score_n = -norm_s[num_shots:, :]                      # (num_shots, Bt)

    # ---- MarginRankingLoss (y=1, mean over B*num_shots) grad wrt r_meta ----
    # loss = mean(relu(margin - (p - n)));  d/dp = -ind/count, d/dn = +ind/count
    ind = ((margin - (score_p - score_n)) > 0.0).astype(jnp.float32)
    unit_p = diff_s[:, :num_shots, :] * inv_norm_s[None, :num_shots, :]
    unit_n = diff_s[:, num_shots:, :] * inv_norm_s[None, num_shots:, :]
    grad_r = jnp.sum(ind[None, :, :] * (unit_p - unit_n),
                     axis=1, keepdims=True) * inv_count   # (D, 1, Bt)

    # ---- MAML inner step: rel_q = r_meta - beta * r_meta.grad ---------------
    rel_q = r_meta - beta * grad_r                        # (D, 1, Bt)

    # ---- EmbeddingLearner on query ------------------------------------------
    que = que_ref[...].astype(jnp.float32)                # (D, 2*n_que, Bt)
    hq = que[:, :n_que, :]
    tq = que[:, n_que:, :]
    diff_q = hq + rel_q - tq
    ssq_q = jnp.sum(diff_q * diff_q, axis=0)              # (n_que, Bt)
    out_ref[...] = (-(ssq_q * jax.lax.rsqrt(ssq_q + eps))).astype(out_ref.dtype)


def meta_learner_forward(embeddings, support_idx, support_neg_idx,
                         query_idx, query_neg_idx, *, beta, margin,
                         b_tile=None):
    """Lane-dense gather (heads+tails fused, tasks on lanes) + fused Pallas kernel."""
    B, num_shots, _ = support_idx.shape
    num_sneg = support_neg_idx.shape[1]
    num_queries = query_idx.shape[1]
    num_qneg = query_neg_idx.shape[1]
    E, D = embeddings.shape
    assert num_sneg == num_shots, (
        "MarginRankingLoss pairs p/n elementwise; need #support == #support_neg")

    n_sup = num_shots + num_sneg
    n_que = num_queries + num_qneg
    itemsize = jnp.dtype(embeddings.dtype).itemsize

    # ---- per-generation VMEM budget ----------------------------------------
    try:
        vmem_cap = int(pltpu.get_tpu_info().vmem_capacity_bytes)
    except Exception:
        vmem_cap = 64 << 20                       # conservative (v7x per-TC)
    vmem_limit = int(min(max(vmem_cap * 3 // 4, 8 << 20), 96 << 20))

    # ---- batch-tile selection (lane axis = tasks) ---------------------------
    pad8 = lambda v: -(-v // 8) * 8
    # VMEM bytes of one task in one pipeline stage (support + query, sublane-padded)
    task_bytes = itemsize * D * (pad8(2 * n_sup) + pad8(2 * n_que))
    target_block = min(16 << 20, vmem_limit // 4)     # 2 streams x 2 buffers + output
    cap = max(1, target_block // task_bytes)
    if b_tile is None:
        if B <= cap and B % 128 != 0:
            b_tile = B                                # single full-extent block, no padding
        else:
            b_tile = max(128, min((cap // 128) * 128,
                                  ((B + 127) // 128) * 128, 2048))
    b_tile = int(max(1, b_tile))
    B_pad = -(-B // b_tile) * b_tile
    grid = (B_pad // b_tile,)

    # ---- index prep: only tiny int arrays are concatenated/padded -----------
    s_idx = jnp.concatenate([support_idx, support_neg_idx], axis=1)   # (B, n_sup, 2)
    q_idx = jnp.concatenate([query_idx, query_neg_idx], axis=1)       # (B, n_que, 2)
    if B_pad > B:
        s_idx = jnp.pad(s_idx, ((0, B_pad - B), (0, 0), (0, 0)))
        q_idx = jnp.pad(q_idx, ((0, B_pad - B), (0, 0), (0, 0)))
    # rows [0:n) = head indices, rows [n:2n) = tail indices; columns = tasks
    s_gidx = jnp.concatenate([s_idx[..., 0].T, s_idx[..., 1].T], axis=0)  # (2*n_sup, B_pad)
    q_gidx = jnp.concatenate([q_idx[..., 0].T, q_idx[..., 1].T], axis=0)  # (2*n_que, B_pad)

    # TODO(synk): in a real model keep the table stored transposed to avoid this op.
    emb_T = embeddings.T                                                  # (D, E)
    sup = jnp.take(emb_T, s_gidx, axis=1)     # (D, 2*n_sup, B_pad)  lane-dense
    que = jnp.take(emb_T, q_gidx, axis=1)     # (D, 2*n_que, B_pad)

    in_bytes = itemsize * D * 2 * (n_sup + n_que) * B_pad
    out_bytes = 4 * n_que * B_pad
    cost = pl.CostEstimate(
        flops=int(10 * B_pad * (n_sup + n_que) * D),
        transcendentals=int(B_pad * (n_sup + n_que)),
        bytes_accessed=int(in_bytes + out_bytes),
    )

    kernel = functools.partial(
        meta_kernel,
        num_shots=num_shots,
        n_sup=n_sup,
        n_que=n_que,
        beta=float(beta),
        margin=float(margin),
        inv_count=1.0 / float(B * num_shots),   # full-batch mean (MarginRankingLoss 'mean')
        eps=1e-12,
    )

    scores = pl.pallas_call(
        kernel,
        out_shape=jax.ShapeDtypeStruct((n_que, B_pad), jnp.float32),
        grid=grid,
        in_specs=[
            pl.BlockSpec((D, 2 * n_sup, b_tile), lambda b: (0, 0, b)),
            pl.BlockSpec((D, 2 * n_que, b_tile), lambda b: (0, 0, b)),
        ],
        out_specs=pl.BlockSpec((n_que, b_tile), lambda b: (0, b)),
        compiler_params=pltpu.CompilerParams(
            dimension_semantics=("parallel",),
            vmem_limit_bytes=vmem_limit,
        ),
        cost_estimate=cost,
    )(sup, que)

    scores = scores[:, :B]                                 # (n_que, B) drop padded tasks
    return scores[:num_queries, :].T, scores[num_queries:, :].T


if __name__ == "__main__":
    key = jax.random.PRNGKey(0)
    k_emb, k_s, k_sn, k_q, k_qn = jax.random.split(key, 5)

    num_entities, embed_dim = 64, 32
    B, num_shots, num_queries = 2, 3, 4

    # nn.init.xavier_uniform_ on (num_entities, embed_dim)
    bound = (6.0 / (num_entities + embed_dim)) ** 0.5
    embeddings = jax.random.uniform(
        k_emb, (num_entities, embed_dim), jnp.float32, -bound, bound)

    # tasks -> (head, tail) entity-index pairs per triple
    support_idx = jax.random.randint(k_s, (B, num_shots, 2), 0, num_entities)
    support_neg_idx = jax.random.randint(k_sn, (B, num_shots, 2), 0, num_entities)
    query_idx = jax.random.randint(k_q, (B, num_queries, 2), 0, num_entities)
    query_neg_idx = jax.random.randint(k_qn, (B, num_queries, 2), 0, num_entities)

    p_score, n_score = meta_learner_forward(
        embeddings, support_idx, support_neg_idx, query_idx, query_neg_idx,
        beta=0.1, margin=1.0)
    jax.block_until_ready((p_score, n_score))

    assert p_score.shape == (B, num_queries)
    assert n_score.shape == (B, query_neg_idx.shape[1])
    assert bool(jnp.all(jnp.isfinite(p_score))) and bool(jnp.all(jnp.isfinite(n_score)))

    # pure-JAX reference of the fused math (same eps-guarded norm)
    def ref_forward(emb, s_i, sn_i, q_i, qn_i, beta, margin):
        gather = lambda idx: (emb[idx[..., 0]], emb[idx[..., 1]])
        hs_p, ts_p = gather(s_i); hs_n, ts_n = gather(sn_i)
        hq_p, tq_p = gather(q_i); hq_n, tq_n = gather(qn_i)
        r = jnp.mean(ts_p - hs_p, axis=1, keepdims=True)

        def score(h, t, r):
            d = h + r - t
            ssq = jnp.sum(d * d, -1)
            inv = jax.lax.rsqrt(ssq + 1e-12)
            return -(ssq * inv), d, inv

        sp, dp, ip = score(hs_p, ts_p, r)
        sn, dn, inn = score(hs_n, ts_n, r)
        ind = ((margin - (sp - sn)) > 0).astype(jnp.float32)
        grad = jnp.sum(ind[..., None] * (dp * ip[..., None] - dn * inn[..., None]),
                       axis=1, keepdims=True) / (s_i.shape[0] * s_i.shape[1])
        rq = r - beta * grad
        return score(hq_p, tq_p, rq)[0], score(hq_n, tq_n, rq)[0]

    rp, rn = ref_forward(embeddings, support_idx, support_neg_idx,
                         query_idx, query_neg_idx, 0.1, 1.0)
    assert bool(jnp.allclose(p_score, rp, atol=1e-5))
    assert bool(jnp.allclose(n_score, rn, atol=1e-5))
    print("KERNEL_OK")
</pallas_src>

<mosaic_0001>
module attributes {stable_mosaic.version = 11 : i64} {
  func.func @meta_kernel(%arg0: i32, %arg1: memref<32x12x2xf32, #tpu.memory_space<vmem>>, %arg2: memref<32x16x2xf32, #tpu.memory_space<vmem>>, %arg3: memref<8x2xf32, #tpu.memory_space<vmem>>) attributes {dimension_semantics = [#tpu.dimension_semantics<parallel>], iteration_bounds = array<i64: 1>, scalar_prefetch = 0 : i64, scratch_operands = 0 : i64, tpu.core_type = #tpu.core_type<tc>, window_params = [{transform_indices = @transform_0, window_bounds = array<i64: 32, 12, 2>}, {transform_indices = @transform_1, window_bounds = array<i64: 32, 16, 2>}, {transform_indices = @transform_2, window_bounds = array<i64: 8, 2>}]} {
    %c0 = arith.constant 0 : index
    %c0_0 = arith.constant 0 : index
    %c0_1 = arith.constant 0 : index
    %0 = vector.load %arg1[%c0, %c0_0, %c0_1] : memref<32x12x2xf32, #tpu.memory_space<vmem>>, vector<32x12x2xf32>
    %1 = vector.extract_strided_slice %0 {offsets = [0, 0, 0], sizes = [32, 6, 2], strides = [1, 1, 1]} : vector<32x12x2xf32> to vector<32x6x2xf32>
    %2 = vector.extract_strided_slice %0 {offsets = [0, 6, 0], sizes = [32, 6, 2], strides = [1, 1, 1]} : vector<32x12x2xf32> to vector<32x6x2xf32>
    %3 = vector.extract_strided_slice %2 {offsets = [0, 0, 0], sizes = [32, 3, 2], strides = [1, 1, 1]} : vector<32x6x2xf32> to vector<32x3x2xf32>
    %4 = vector.extract_strided_slice %1 {offsets = [0, 0, 0], sizes = [32, 3, 2], strides = [1, 1, 1]} : vector<32x6x2xf32> to vector<32x3x2xf32>
    %5 = arith.subf %3, %4 : vector<32x3x2xf32>
    %cst = arith.constant dense<0.000000e+00> : vector<32x2xf32>
    %6 = vector.multi_reduction <add>, %5, %cst [1] : vector<32x3x2xf32> to vector<32x2xf32>
    %7 = vector.shape_cast %6 : vector<32x2xf32> to vector<32x1x2xf32>
    %cst_2 = arith.constant 3.000000e+00 : f32
    %8 = vector.broadcast %cst_2 : f32 to vector<32x1x2xf32>
    %9 = arith.divf %7, %8 : vector<32x1x2xf32>
    %10 = vector.broadcast %9 : vector<32x1x2xf32> to vector<32x6x2xf32>
    %11 = arith.addf %1, %10 : vector<32x6x2xf32>
    %12 = arith.subf %11, %2 : vector<32x6x2xf32>
    %13 = arith.mulf %12, %12 : vector<32x6x2xf32>
    %cst_3 = arith.constant dense<0.000000e+00> : vector<6x2xf32>
    %14 = vector.multi_reduction <add>, %13, %cst_3 [0] : vector<32x6x2xf32> to vector<6x2xf32>
    %cst_4 = arith.constant 9.99999996E-13 : f32
    %15 = vector.broadcast %cst_4 : f32 to vector<6x2xf32>
    %16 = arith.addf %14, %15 : vector<6x2xf32>
    %17 = math.rsqrt %16 : vector<6x2xf32>
    %18 = arith.mulf %14, %17 : vector<6x2xf32>
    %19 = vector.extract_strided_slice %18 {offsets = [0, 0], sizes = [3, 2], strides = [1, 1]} : vector<6x2xf32> to vector<3x2xf32>
    %cst_5 = arith.constant 0.000000e+00 : f32
    %20 = vector.broadcast %cst_5 : f32 to vector<3x2xf32>
    %21 = arith.subf %20, %19 : vector<3x2xf32>
    %22 = vector.extract_strided_slice %18 {offsets = [3, 0], sizes = [3, 2], strides = [1, 1]} : vector<6x2xf32> to vector<3x2xf32>
    %cst_6 = arith.constant 0.000000e+00 : f32
    %23 = vector.broadcast %cst_6 : f32 to vector<3x2xf32>
    %24 = arith.subf %23, %22 : vector<3x2xf32>
    %25 = arith.subf %21, %24 : vector<3x2xf32>
    %cst_7 = arith.constant 1.000000e+00 : f32
    %26 = vector.broadcast %cst_7 : f32 to vector<3x2xf32>
    %27 = arith.subf %26, %25 : vector<3x2xf32>
    %cst_8 = arith.constant 0.000000e+00 : f32
    %28 = vector.broadcast %cst_8 : f32 to vector<3x2xf32>
    %29 = arith.cmpf ogt, %27, %28 : vector<3x2xf32>
    %30 = arith.extui %29 : vector<3x2xi1> to vector<3x2xi32>
    %31 = arith.sitofp %30 : vector<3x2xi32> to vector<3x2xf32>
    %32 = vector.extract_strided_slice %12 {offsets = [0, 0, 0], sizes = [32, 3, 2], strides = [1, 1, 1]} : vector<32x6x2xf32> to vector<32x3x2xf32>
    %33 = vector.extract_strided_slice %17 {offsets = [0, 0], sizes = [3, 2], strides = [1, 1]} : vector<6x2xf32> to vector<3x2xf32>
    %34 = vector.shape_cast %33 : vector<3x2xf32> to vector<1x3x2xf32>
    %35 = vector.broadcast %34 : vector<1x3x2xf32> to vector<32x3x2xf32>
    %36 = arith.mulf %32, %35 : vector<32x3x2xf32>
    %37 = vector.extract_strided_slice %12 {offsets = [0, 3, 0], sizes = [32, 3, 2], strides = [1, 1, 1]} : vector<32x6x2xf32> to vector<32x3x2xf32>
    %38 = vector.extract_strided_slice %17 {offsets = [3, 0], sizes = [3, 2], strides = [1, 1]} : vector<6x2xf32> to vector<3x2xf32>
    %39 = vector.shape_cast %38 : vector<3x2xf32> to vector<1x3x2xf32>
    %40 = vector.broadcast %39 : vector<1x3x2xf32> to vector<32x3x2xf32>
    %41 = arith.mulf %37, %40 : vector<32x3x2xf32>
    %42 = vector.shape_cast %31 : vector<3x2xf32> to vector<1x3x2xf32>
    %43 = arith.subf %36, %41 : vector<32x3x2xf32>
    %44 = vector.broadcast %42 : vector<1x3x2xf32> to vector<32x3x2xf32>
    %45 = arith.mulf %44, %43 : vector<32x3x2xf32>
    %cst_9 = arith.constant dense<0.000000e+00> : vector<32x2xf32>
    %46 = vector.multi_reduction <add>, %45, %cst_9 [1] : vector<32x3x2xf32> to vector<32x2xf32>
    %47 = vector.shape_cast %46 : vector<32x2xf32> to vector<32x1x2xf32>
    %cst_10 = arith.constant 0.166666672 : f32
    %48 = vector.broadcast %cst_10 : f32 to vector<32x1x2xf32>
    %49 = arith.mulf %47, %48 : vector<32x1x2xf32>
    %cst_11 = arith.constant 1.000000e-01 : f32
    %50 = vector.broadcast %cst_11 : f32 to vector<32x1x2xf32>
    %51 = arith.mulf %50, %49 : vector<32x1x2xf32>
    %52 = arith.subf %9, %51 : vector<32x1x2xf32>
    %c0_12 = arith.constant 0 : index
    %c0_13 = arith.constant 0 : index
    %c0_14 = arith.constant 0 : index
    %53 = vector.load %arg2[%c0_12, %c0_13, %c0_14] : memref<32x16x2xf32, #tpu.memory_space<vmem>>, vector<32x16x2xf32>
    %54 = vector.extract_strided_slice %53 {offsets = [0, 0, 0], sizes = [32, 8, 2], strides = [1, 1, 1]} : vector<32x16x2xf32> to vector<32x8x2xf32>
    %55 = vector.extract_strided_slice %53 {offsets = [0, 8, 0], sizes = [32, 8, 2], strides = [1, 1, 1]} : vector<32x16x2xf32> to vector<32x8x2xf32>
    %56 = vector.broadcast %52 : vector<32x1x2xf32> to vector<32x8x2xf32>
    %57 = arith.addf %54, %56 : vector<32x8x2xf32>
    %58 = arith.subf %57, %55 : vector<32x8x2xf32>
    %59 = arith.mulf %58, %58 : vector<32x8x2xf32>
    %cst_15 = arith.constant dense<0.000000e+00> : vector<8x2xf32>
    %60 = vector.multi_reduction <add>, %59, %cst_15 [0] : vector<32x8x2xf32> to vector<8x2xf32>
    %cst_16 = arith.constant 9.99999996E-13 : f32
    %61 = vector.broadcast %cst_16 : f32 to vector<8x2xf32>
    %62 = arith.addf %60, %61 : vector<8x2xf32>
    %63 = math.rsqrt %62 : vector<8x2xf32>
    %64 = arith.mulf %60, %63 : vector<8x2xf32>
    %cst_17 = arith.constant 0.000000e+00 : f32
    %65 = vector.broadcast %cst_17 : f32 to vector<8x2xf32>
    %66 = arith.subf %65, %64 : vector<8x2xf32>
    %c0_18 = arith.constant 0 : index
    %c0_19 = arith.constant 0 : index
    %67 = vector.load %arg3[%c0_18, %c0_19] : memref<8x2xf32, #tpu.memory_space<vmem>>, vector<8x2xf32>
    tpu.vector_store %arg3[%c0_18, %c0_19], %66 {strides = array<i32>} : memref<8x2xf32, #tpu.memory_space<vmem>>, vector<8x2xf32>,
    return
  }
  func.func @transform_0(%arg0: i32) -> (i32, i32, i32) {
    %c0_i32 = arith.constant 0 : i32
    %c0_i32_0 = arith.constant 0 : i32
    %c0_i32_1 = arith.constant 0 : i32
    return %c0_i32, %c0_i32_0, %arg0 : i32, i32, i32
  }
  func.func @transform_1(%arg0: i32) -> (i32, i32, i32) {
    %c0_i32 = arith.constant 0 : i32
    %c0_i32_0 = arith.constant 0 : i32
    %c0_i32_1 = arith.constant 0 : i32
    return %c0_i32, %c0_i32_0, %arg0 : i32, i32, i32
  }
  func.func @transform_2(%arg0: i32) -> (i32, i32) {
    %c0_i32 = arith.constant 0 : i32
    %c0_i32_0 = arith.constant 0 : i32
    return %c0_i32, %arg0 : i32, i32
  }
}

</mosaic_0001>

<llo_original>
// kernel: tpu_custom_call.1
$region0: #{tpu_custom_call.1}
  #allocation0 [shape = 'u32[]', space=smem, size = 0x4, offset = 0x4, fixed_abs, tag = 'smem constant byte address 0x4 - core index']
  #allocation1 [shape = 'u32[144,128]{1,0:T(1,128)}', space=vmem, size = 0x12000, scoped, tag = 'internal scratch']
  %s0 = inlined_call_operand.vmem [shape: f32[32,12,2], index: 0, kind: input, shape index: {}]
  %s1 = inlined_call_operand.vmem [shape: f32[32,16,2], index: 1, kind: input, shape index: {}]
  %s2 = inlined_call_operand.vmem [shape: f32[8,2], index: 2, kind: output, shape index: {}]
  %s3 = sld [smem:[#allocation0]]
  $region18: #{tpu_custom_call.1} parent=0
    _
  %s5 = ssub.s32 1, %s3
  %s6 = scalar_select 0, %s5, %s3
  // Predicated region
  $region2: #{tpu_custom_call.1} parent=0 // pred_check
    _
  $region3: #{tpu_custom_call.1} parent=0 // pred_check_branch
    %8 = sbr.rel (0) target = $region5
  $region4: #{tpu_custom_call.1} parent=0 // pred_region
    _
  $region5: #{tpu_custom_call.1} parent=0 // pred_fallthru
    _
  // Predicated region
  $region6: #{tpu_custom_call.1} parent=0 // pred_check
    _
  $region7: #{tpu_custom_call.1} parent=0 // pred_check_branch
    %10 = sbr.rel (0) target = $region9
  $region8: #{tpu_custom_call.1} parent=0 // pred_region
    _
  $region9: #{tpu_custom_call.1} parent=0 // pred_fallthru
    _
  %v11 = vld [vmem:[%s0] sm:$0xff]
  %v12 = vld [vmem:[%s0 + $0x8] sm:$0xf]
  %v13 = vld [vmem:[%s0 + $0x10] sm:$0xff]
  %v14 = vld [vmem:[%s0 + $0x18] sm:$0xf]
  %v15 = vld [vmem:[%s0 + $0x20] sm:$0xff]
  %v16 = vld [vmem:[%s0 + $0x28] sm:$0xf]
  %v17 = vld [vmem:[%s0 + $0x30] sm:$0xff]
  %v18 = vld [vmem:[%s0 + $0x38] sm:$0xf]
  %v19 = vld [vmem:[%s0 + $0x40] sm:$0xff]
  %v20 = vld [vmem:[%s0 + $0x48] sm:$0xf]
  %v21 = vld [vmem:[%s0 + $0x50] sm:$0xff]
  %v22 = vld [vmem:[%s0 + $0x58] sm:$0xf]
  %v23 = vld [vmem:[%s0 + $0x60] sm:$0xff]
  %v24 = vld [vmem:[%s0 + $0x68] sm:$0xf]
  %v25 = vld [vmem:[%s0 + $0x70] sm:$0xff]
  %v26 = vld [vmem:[%s0 + $0x78] sm:$0xf]
  %v27 = vld [vmem:[%s0 + $0x80] sm:$0xff]
  %v28 = vld [vmem:[%s0 + $0x88] sm:$0xf]
  %v29 = vld [vmem:[%s0 + $0x90] sm:$0xff]
  %v30 = vld [vmem:[%s0 + $0x98] sm:$0xf]
  %v31 = vld [vmem:[%s0 + $0xa0] sm:$0xff]
  %v32 = vld [vmem:[%s0 + $0xa8] sm:$0xf]
  %v33 = vld [vmem:[%s0 + $0xb0] sm:$0xff]
  %v34 = vld [vmem:[%s0 + $0xb8] sm:$0xf]
  %v35 = vld [vmem:[%s0 + $0xc0] sm:$0xff]
  %v36 = vld [vmem:[%s0 + $0xc8] sm:$0xf]
  %v37 = vld [vmem:[%s0 + $0xd0] sm:$0xff]
  %v38 = vld [vmem:[%s0 + $0xd8] sm:$0xf]
  %v39 = vld [vmem:[%s0 + $0xe0] sm:$0xff]
  %v40 = vld [vmem:[%s0 + $0xe8] sm:$0xf]
  %v41 = vld [vmem:[%s0 + $0xf0] sm:$0xff]
  %v42 = vld [vmem:[%s0 + $0xf8] sm:$0xf]
  %v43 = vld [vmem:[%s0 + $0x100] sm:$0xff]
  %v44 = vld [vmem:[%s0 + $0x108] sm:$0xf]
  %v45 = vld [vmem:[%s0 + $0x110] sm:$0xff]
  %v46 = vld [vmem:[%s0 + $0x118] sm:$0xf]
  %v47 = vld [vmem:[%s0 + $0x120] sm:$0xff]
  %v48 = vld [vmem:[%s0 + $0x128] sm:$0xf]
  %v49 = vld [vmem:[%s0 + $0x130] sm:$0xff]
  %v50 = vld [vmem:[%s0 + $0x138] sm:$0xf]
  %v51 = vld [vmem:[%s0 + $0x140] sm:$0xff]
  %v52 = vld [vmem:[%s0 + $0x148] sm:$0xf]
  %v53 = vld [vmem:[%s0 + $0x150] sm:$0xff]
  %v54 = vld [vmem:[%s0 + $0x158] sm:$0xf]
  %v55 = vld [vmem:[%s0 + $0x160] sm:$0xff]
  %v56 = vld [vmem:[%s0 + $0x168] sm:$0xf]
  %v57 = vld [vmem:[%s0 + $0x170] sm:$0xff]
  %v58 = vld [vmem:[%s0 + $0x178] sm:$0xf]
  %v59 = vld [vmem:[%s0 + $0x180] sm:$0xff]
  %v60 = vld [vmem:[%s0 + $0x188] sm:$0xf]
  %v61 = vld [vmem:[%s0 + $0x190] sm:$0xff]
  %v62 = vld [vmem:[%s0 + $0x198] sm:$0xf]
  %v63 = vld [vmem:[%s0 + $0x1a0] sm:$0xff]
  %v64 = vld [vmem:[%s0 + $0x1a8] sm:$0xf]
  %v65 = vld [vmem:[%s0 + $0x1b0] sm:$0xff]
  %v66 = vld [vmem:[%s0 + $0x1b8] sm:$0xf]
  %v67 = vld [vmem:[%s0 + $0x1c0] sm:$0xff]
  %v68 = vld [vmem:[%s0 + $0x1c8] sm:$0xf]
  %v69 = vld [vmem:[%s0 + $0x1d0] sm:$0xff]
  %v70 = vld [vmem:[%s0 + $0x1d8] sm:$0xf]
  %v71 = vld [vmem:[%s0 + $0x1e0] sm:$0xff]
  %v72 = vld [vmem:[%s0 + $0x1e8] sm:$0xf]
  %v73 = vld [vmem:[%s0 + $0x1f0] sm:$0xff]
  %v74 = vld [vmem:[%s0 + $0x1f8] sm:$0xf]
  %v107 = vrot.slane %v11, 2
  %v108 = vrot.slane %v13, 2
  %v109 = vrot.slane %v15, 2
  %v110 = vrot.slane %v17, 2
  %v111 = vrot.slane %v19, 2
  %v112 = vrot.slane %v21, 2
  %v113 = vrot.slane %v23, 2
  %v114 = vrot.slane %v25, 2
  %v115 = vrot.slane %v27, 2
  %v116 = vrot.slane %v29, 2
  %v117 = vrot.slane %v31, 2
  %v118 = vrot.slane %v33, 2
  %v119 = vrot.slane %v35, 2
  %v120 = vrot.slane %v37, 2
  %v121 = vrot.slane %v39, 2
  %v122 = vrot.slane %v41, 2
  %v123 = vrot.slane %v43, 2
  %v124 = vrot.slane %v45, 2
  %v125 = vrot.slane %v47, 2
  %v126 = vrot.slane %v49, 2
  %v127 = vrot.slane %v51, 2
  %v128 = vrot.slane %v53, 2
  %v129 = vrot.slane %v55, 2
  %v130 = vrot.slane %v57, 2
  %v131 = vrot.slane %v59, 2
  %v132 = vrot.slane %v61, 2
  %v133 = vrot.slane %v63, 2
  %v134 = vrot.slane %v65, 2
  %v135 = vrot.slane %v67, 2
  %v136 = vrot.slane %v69, 2
  %v137 = vrot.slane %v71, 2
  %v138 = vrot.slane %v73, 2
  %v171 = vsub.f32 %v11, %v107
  %v172 = vsub.f32 %v12, %v107
  %v173 = vsub.f32 %v13, %v108
  %v174 = vsub.f32 %v14, %v108
  %v175 = vsub.f32 %v15, %v109
  %v176 = vsub.f32 %v16, %v109
  %v177 = vsub.f32 %v17, %v110
  %v178 = vsub.f32 %v18, %v110
  %v179 = vsub.f32 %v19, %v111
  %v180 = vsub.f32 %v20, %v111
  %v181 = vsub.f32 %v21, %v112
  %v182 = vsub.f32 %v22, %v112
  %v183 = vsub.f32 %v23, %v113
  %v184 = vsub.f32 %v24, %v113
  %v185 = vsub.f32 %v25, %v114
  %v186 = vsub.f32 %v26, %v114
  %v187 = vsub.f32 %v27, %v115
  %v188 = vsub.f32 %v28, %v115
  %v189 = vsub.f32 %v29, %v116
  %v190 = vsub.f32 %v30, %v116
  %v191 = vsub.f32 %v31, %v117
  %v192 = vsub.f32 %v32, %v117
  %v193 = vsub.f32 %v33, %v118
  %v194 = vsub.f32 %v34, %v118
  %v195 = vsub.f32 %v35, %v119
  %v196 = vsub.f32 %v36, %v119
  %v197 = vsub.f32 %v37, %v120
  %v198 = vsub.f32 %v38, %v120
  %v199 = vsub.f32 %v39, %v121
  %v200 = vsub.f32 %v40, %v121
  %v201 = vsub.f32 %v41, %v122
  %v202 = vsub.f32 %v42, %v122
  %v203 = vsub.f32 %v43, %v123
  %v204 = vsub.f32 %v44, %v123
  %v205 = vsub.f32 %v45, %v124
  %v206 = vsub.f32 %v46, %v124
  %v207 = vsub.f32 %v47, %v125
  %v208 = vsub.f32 %v48, %v125
  %v209 = vsub.f32 %v49, %v126
  %v210 = vsub.f32 %v50, %v126
  %v211 = vsub.f32 %v51, %v127
  %v212 = vsub.f32 %v52, %v127
  %v213 = vsub.f32 %v53, %v128
  %v214 = vsub.f32 %v54, %v128
  %v215 = vsub.f32 %v55, %v129
  %v216 = vsub.f32 %v56, %v129
  %v217 = vsub.f32 %v57, %v130
  %v218 = vsub.f32 %v58, %v130
  %v219 = vsub.f32 %v59, %v131
  %v220 = vsub.f32 %v60, %v131
  %v221 = vsub.f32 %v61, %v132
  %v222 = vsub.f32 %v62, %v132
  %v223 = vsub.f32 %v63, %v133
  %v224 = vsub.f32 %v64, %v133
  %v225 = vsub.f32 %v65, %v134
  %v226 = vsub.f32 %v66, %v134
  %v227 = vsub.f32 %v67, %v135
  %v228 = vsub.f32 %v68, %v135
  %v229 = vsub.f32 %v69, %v136
  %v230 = vsub.f32 %v70, %v136
  %v231 = vsub.f32 %v71, %v137
  %v232 = vsub.f32 %v72, %v137
  %v233 = vsub.f32 %v73, %v138
  %v234 = vsub.f32 %v74, %v138
  %vm299 = vcmask 1041408
  %v300 = vrot.slane %v171, 6
  %v301 = vrot.slane %v172, 6
  %v302 = vsel %vm299, %v300, %v301
  %v303 = vrot.slane %v173, 6
  %v304 = vrot.slane %v174, 6
  %v305 = vsel %vm299, %v303, %v304
  %v306 = vrot.slane %v175, 6
  %v307 = vrot.slane %v176, 6
  %v308 = vsel %vm299, %v306, %v307
  %v309 = vrot.slane %v177, 6
  %v310 = vrot.slane %v178, 6
  %v311 = vsel %vm299, %v309, %v310
  %v312 = vrot.slane %v179, 6
  %v313 = vrot.slane %v180, 6
  %v314 = vsel %vm299, %v312, %v313
  %v315 = vrot.slane %v181, 6
  %v316 = vrot.slane %v182, 6
  %v317 = vsel %vm299, %v315, %v316
  %v318 = vrot.slane %v183, 6
  %v319 = vrot.slane %v184, 6
  %v320 = vsel %vm299, %v318, %v319
  %v321 = vrot.slane %v185, 6
  %v322 = vrot.slane %v186, 6
  %v323 = vsel %vm299, %v321, %v322
  %v324 = vrot.slane %v187, 6
  %v325 = vrot.slane %v188, 6
  %v326 = vsel %vm299, %v324, %v325
  %v327 = vrot.slane %v189, 6
  %v328 = vrot.slane %v190, 6
  %v329 = vsel %vm299, %v327, %v328
  %v330 = vrot.slane %v191, 6
  %v331 = vrot.slane %v192, 6
  %v332 = vsel %vm299, %v330, %v331
  %v333 = vrot.slane %v193, 6
  %v334 = vrot.slane %v194, 6
  %v335 = vsel %vm299, %v333, %v334
  %v336 = vrot.slane %v195, 6
  %v337 = vrot.slane %v196, 6
  %v338 = vsel %vm299, %v336, %v337
  %v339 = vrot.slane %v197, 6
  %v340 = vrot.slane %v198, 6
  %v341 = vsel %vm299, %v339, %v340
  %v342 = vrot.slane %v199, 6
  %v343 = vrot.slane %v200, 6
  %v344 = vsel %vm299, %v342, %v343
  %v345 = vrot.slane %v201, 6
  %v346 = vrot.slane %v202, 6
  %v347 = vsel %vm299, %v345, %v346
  %v348 = vrot.slane %v203, 6
  %v349 = vrot.slane %v204, 6
  %v350 = vsel %vm299, %v348, %v349
  %v351 = vrot.slane %v205, 6
  %v352 = vrot.slane %v206, 6
  %v353 = vsel %vm299, %v351, %v352
  %v354 = vrot.slane %v207, 6
  %v355 = vrot.slane %v208, 6
  %v356 = vsel %vm299, %v354, %v355
  %v357 = vrot.slane %v209, 6
  %v358 = vrot.slane %v210, 6
  %v359 = vsel %vm299, %v357, %v358
  %v360 = vrot.slane %v211, 6
  %v361 = vrot.slane %v212, 6
  %v362 = vsel %vm299, %v360, %v361
  %v363 = vrot.slane %v213, 6
  %v364 = vrot.slane %v214, 6
  %v365 = vsel %vm299, %v363, %v364
  %v366 = vrot.slane %v215, 6
  %v367 = vrot.slane %v216, 6
  %v368 = vsel %vm299, %v366, %v367
  %v369 = vrot.slane %v217, 6
  %v370 = vrot.slane %v218, 6
  %v371 = vsel %vm299, %v369, %v370
  %v372 = vrot.slane %v219, 6
  %v373 = vrot.slane %v220, 6
  %v374 = vsel %vm299, %v372, %v373
  %v375 = vrot.slane %v221, 6
  %v376 = vrot.slane %v222, 6
  %v377 = vsel %vm299, %v375, %v376
  %v378 = vrot.slane %v223, 6
  %v379 = vrot.slane %v224, 6
  %v380 = vsel %vm299, %v378, %v379
  %v381 = vrot.slane %v225, 6
  %v382 = vrot.slane %v226, 6
  %v383 = vsel %vm299, %v381, %v382
  %v384 = vrot.slane %v227, 6
  %v385 = vrot.slane %v228, 6
  %v386 = vsel %vm299, %v384, %v385
  %v387 = vrot.slane %v229, 6
  %v388 = vrot.slane %v230, 6
  %v389 = vsel %vm299, %v387, %v388
  %v390 = vrot.slane %v231, 6
  %v391 = vrot.slane %v232, 6
  %v392 = vsel %vm299, %v390, %v391
  %v393 = vrot.slane %v233, 6
  %v394 = vrot.slane %v234, 6
  %v395 = vsel %vm299, %v393, %v394
  %vm428 = vcmask 10240
  %v429 = vsel %vm428, %v302, 0.0
  %v430 = vrot.slane %v429, 4
  %v431 = vadd.f32 %v429, %v430
  %v432 = vrot.slane %v431, 2
  %v433 = vadd.f32 %v431, %v432
  %v434 = vrot.slane %v433, 1
  %v435 = vadd.f32 %v433, %v434
  %v436 = vsel %vm428, %v305, 0.0
  %v437 = vrot.slane %v436, 4
  %v438 = vadd.f32 %v436, %v437
  %v439 = vrot.slane %v438, 2
  %v440 = vadd.f32 %v438, %v439
  %v441 = vrot.slane %v440, 1
  %v442 = vadd.f32 %v440, %v441
  %v443 = vsel %vm428, %v308, 0.0
  %v444 = vrot.slane %v443, 4
  %v445 = vadd.f32 %v443, %v444
  %v446 = vrot.slane %v445, 2
  %v447 = vadd.f32 %v445, %v446
  %v448 = vrot.slane %v447, 1
  %v449 = vadd.f32 %v447, %v448
  %v450 = vsel %vm428, %v311, 0.0
  %v451 = vrot.slane %v450, 4
  %v452 = vadd.f32 %v450, %v451
  %v453 = vrot.slane %v452, 2
  %v454 = vadd.f32 %v452, %v453
  %v455 = vrot.slane %v454, 1
  %v456 = vadd.f32 %v454, %v455
  %v457 = vsel %vm428, %v314, 0.0
  %v458 = vrot.slane %v457, 4
  %v459 = vadd.f32 %v457, %v458
  %v460 = vrot.slane %v459, 2
  %v461 = vadd.f32 %v459, %v460
  %v462 = vrot.slane %v461, 1
  %v463 = vadd.f32 %v461, %v462
  %v464 = vsel %vm428, %v317, 0.0
  %v465 = vrot.slane %v464, 4
  %v466 = vadd.f32 %v464, %v465
  %v467 = vrot.slane %v466, 2
  %v468 = vadd.f32 %v466, %v467
  %v469 = vrot.slane %v468, 1
  %v470 = vadd.f32 %v468, %v469
  %v471 = vsel %vm428, %v320, 0.0
  %v472 = vrot.slane %v471, 4
  %v473 = vadd.f32 %v471, %v472
  %v474 = vrot.slane %v473, 2
  %v475 = vadd.f32 %v473, %v474
  %v476 = vrot.slane %v475, 1
  %v477 = vadd.f32 %v475, %v476
  %v478 = vsel %vm428, %v323, 0.0
  %v479 = vrot.slane %v478, 4
  %v480 = vadd.f32 %v478, %v479
  %v481 = vrot.slane %v480, 2
  %v482 = vadd.f32 %v480, %v481
  %v483 = vrot.slane %v482, 1
  %v484 = vadd.f32 %v482, %v483
  %v485 = vsel %vm428, %v326, 0.0
  %v486 = vrot.slane %v485, 4
  %v487 = vadd.f32 %v485, %v486
  %v488 = vrot.slane %v487, 2
  %v489 = vadd.f32 %v487, %v488
  %v490 = vrot.slane %v489, 1
  %v491 = vadd.f32 %v489, %v490
  %v492 = vsel %vm428, %v329, 0.0
  %v493 = vrot.slane %v492, 4
  %v494 = vadd.f32 %v492, %v493
  %v495 = vrot.slane %v494, 2
  %v496 = vadd.f32 %v494, %v495
  %v497 = vrot.slane %v496, 1
  %v498 = vadd.f32 %v496, %v497
  %v499 = vsel %vm428, %v332, 0.0
  %v500 = vrot.slane %v499, 4
  %v501 = vadd.f32 %v499, %v500
  %v502 = vrot.slane %v501, 2
  %v503 = vadd.f32 %v501, %v502
  %v504 = vrot.slane %v503, 1
  %v505 = vadd.f32 %v503, %v504
  %v506 = vsel %vm428, %v335, 0.0
  %v507 = vrot.slane %v506, 4
  %v508 = vadd.f32 %v506, %v507
  %v509 = vrot.slane %v508, 2
  %v510 = vadd.f32 %v508, %v509
  %v511 = vrot.slane %v510, 1
  %v512 = vadd.f32 %v510, %v511
  %v513 = vsel %vm428, %v338, 0.0
  %v514 = vrot.slane %v513, 4
  %v515 = vadd.f32 %v513, %v514
  %v516 = vrot.slane %v515, 2
  %v517 = vadd.f32 %v515, %v516
  %v518 = vrot.slane %v517, 1
  %v519 = vadd.f32 %v517, %v518
  %v520 = vsel %vm428, %v341, 0.0
  %v521 = vrot.slane %v520, 4
  %v522 = vadd.f32 %v520, %v521
  %v523 = vrot.slane %v522, 2
  %v524 = vadd.f32 %v522, %v523
  %v525 = vrot.slane %v524, 1
  %v526 = vadd.f32 %v524, %v525
  %v527 = vsel %vm428, %v344, 0.0
  %v528 = vrot.slane %v527, 4
  %v529 = vadd.f32 %v527, %v528
  %v530 = vrot.slane %v529, 2
  %v531 = vadd.f32 %v529, %v530
  %v532 = vrot.slane %v531, 1
  %v533 = vadd.f32 %v531, %v532
  %v534 = vsel %vm428, %v347, 0.0
  %v535 = vrot.slane %v534, 4
  %v536 = vadd.f32 %v534, %v535
  %v537 = vrot.slane %v536, 2
  %v538 = vadd.f32 %v536, %v537
  %v539 = vrot.slane %v538, 1
  %v540 = vadd.f32 %v538, %v539
  %v541 = vsel %vm428, %v350, 0.0
  %v542 = vrot.slane %v541, 4
  %v543 = vadd.f32 %v541, %v542
  %v544 = vrot.slane %v543, 2
  %v545 = vadd.f32 %v543, %v544
  %v546 = vrot.slane %v545, 1
  %v547 = vadd.f32 %v545, %v546
  %v548 = vsel %vm428, %v353, 0.0
  %v549 = vrot.slane %v548, 4
  %v550 = vadd.f32 %v548, %v549
  %v551 = vrot.slane %v550, 2
  %v552 = vadd.f32 %v550, %v551
  %v553 = vrot.slane %v552, 1
  %v554 = vadd.f32 %v552, %v553
  %v555 = vsel %vm428, %v356, 0.0
  %v556 = vrot.slane %v555, 4
  %v557 = vadd.f32 %v555, %v556
  %v558 = vrot.slane %v557, 2
  %v559 = vadd.f32 %v557, %v558
  %v560 = vrot.slane %v559, 1
  %v561 = vadd.f32 %v559, %v560
  %v562 = vsel %vm428, %v359, 0.0
  %v563 = vrot.slane %v562, 4
  %v564 = vadd.f32 %v562, %v563
  %v565 = vrot.slane %v564, 2
  %v566 = vadd.f32 %v564, %v565
  %v567 = vrot.slane %v566, 1
  %v568 = vadd.f32 %v566, %v567
  %v569 = vsel %vm428, %v362, 0.0
  %v570 = vrot.slane %v569, 4
  %v571 = vadd.f32 %v569, %v570
  %v572 = vrot.slane %v571, 2
  %v573 = vadd.f32 %v571, %v572
  %v574 = vrot.slane %v573, 1
  %v575 = vadd.f32 %v573, %v574
  %v576 = vsel %vm428, %v365, 0.0
  %v577 = vrot.slane %v576, 4
  %v578 = vadd.f32 %v576, %v577
  %v579 = vrot.slane %v578, 2
  %v580 = vadd.f32 %v578, %v579
  %v581 = vrot.slane %v580, 1
  %v582 = vadd.f32 %v580, %v581
  %v583 = vsel %vm428, %v368, 0.0
  %v584 = vrot.slane %v583, 4
  %v585 = vadd.f32 %v583, %v584
  %v586 = vrot.slane %v585, 2
  %v587 = vadd.f32 %v585, %v586
  %v588 = vrot.slane %v587, 1
  %v589 = vadd.f32 %v587, %v588
  %v590 = vsel %vm428, %v371, 0.0
  %v591 = vrot.slane %v590, 4
  %v592 = vadd.f32 %v590, %v591
  %v593 = vrot.slane %v592, 2
  %v594 = vadd.f32 %v592, %v593
  %v595 = vrot.slane %v594, 1
  %v596 = vadd.f32 %v594, %v595
  %v597 = vsel %vm428, %v374, 0.0
  %v598 = vrot.slane %v597, 4
  %v599 = vadd.f32 %v597, %v598
  %v600 = vrot.slane %v599, 2
  %v601 = vadd.f32 %v599, %v600
  %v602 = vrot.slane %v601, 1
  %v603 = vadd.f32 %v601, %v602
  %v604 = vsel %vm428, %v377, 0.0
  %v605 = vrot.slane %v604, 4
  %v606 = vadd.f32 %v604, %v605
  %v607 = vrot.slane %v606, 2
  %v608 = vadd.f32 %v606, %v607
  %v609 = vrot.slane %v608, 1
  %v610 = vadd.f32 %v608, %v609
  %v611 = vsel %vm428, %v380, 0.0
  %v612 = vrot.slane %v611, 4
  %v613 = vadd.f32 %v611, %v612
  %v614 = vrot.slane %v613, 2
  %v615 = vadd.f32 %v613, %v614
  %v616 = vrot.slane %v615, 1
  %v617 = vadd.f32 %v615, %v616
  %v618 = vsel %vm428, %v383, 0.0
  %v619 = vrot.slane %v618, 4
  %v620 = vadd.f32 %v618, %v619
  %v621 = vrot.slane %v620, 2
  %v622 = vadd.f32 %v620, %v621
  %v623 = vrot.slane %v622, 1
  %v624 = vadd.f32 %v622, %v623
  %v625 = vsel %vm428, %v386, 0.0
  %v626 = vrot.slane %v625, 4
  %v627 = vadd.f32 %v625, %v626
  %v628 = vrot.slane %v627, 2
  %v629 = vadd.f32 %v627, %v628
  %v630 = vrot.slane %v629, 1
  %v631 = vadd.f32 %v629, %v630
  %v632 = vsel %vm428, %v389, 0.0
  %v633 = vrot.slane %v632, 4
  %v634 = vadd.f32 %v632, %v633
  %v635 = vrot.slane %v634, 2
  %v636 = vadd.f32 %v634, %v635
  %v637 = vrot.slane %v636, 1
  %v638 = vadd.f32 %v636, %v637
  %v639 = vsel %vm428, %v392, 0.0
  %v640 = vrot.slane %v639, 4
  %v641 = vadd.f32 %v639, %v640
  %v642 = vrot.slane %v641, 2
  %v643 = vadd.f32 %v641, %v642
  %v644 = vrot.slane %v643, 1
  %v645 = vadd.f32 %v643, %v644
  %v646 = vsel %vm428, %v395, 0.0
  %v647 = vrot.slane %v646, 4
  %v648 = vadd.f32 %v646, %v647
  %v649 = vrot.slane %v648, 2
  %v650 = vadd.f32 %v648, %v649
  %v651 = vrot.slane %v650, 1
  %v652 = vadd.f32 %v650, %v651
  %v653 = vrcp.pop 3.0
  %v654 = vmul.f32 %v435, %v653
  %v655 = vmul.f32 %v442, %v653
  %v656 = vmul.f32 %v449, %v653
  %v657 = vmul.f32 %v456, %v653
  %v658 = vmul.f32 %v463, %v653
  %v659 = vmul.f32 %v470, %v653
  %v660 = vmul.f32 %v477, %v653
  %v661 = vmul.f32 %v484, %v653
  %v662 = vmul.f32 %v491, %v653
  %v663 = vmul.f32 %v498, %v653
  %v664 = vmul.f32 %v505, %v653
  %v665 = vmul.f32 %v512, %v653
  %v666 = vmul.f32 %v519, %v653
  %v667 = vmul.f32 %v526, %v653
  %v668 = vmul.f32 %v533, %v653
  %v669 = vmul.f32 %v540, %v653
  %v670 = vmul.f32 %v547, %v653
  %v671 = vmul.f32 %v554, %v653
  %v672 = vmul.f32 %v561, %v653
  %v673 = vmul.f32 %v568, %v653
  %v674 = vmul.f32 %v575, %v653
  %v675 = vmul.f32 %v582, %v653
  %v676 = vmul.f32 %v589, %v653
  %v677 = vmul.f32 %v596, %v653
  %v678 = vmul.f32 %v603, %v653
  %v679 = vmul.f32 %v610, %v653
  %v680 = vmul.f32 %v617, %v653
  %v681 = vmul.f32 %v624, %v653
  %v682 = vmul.f32 %v631, %v653
  %v683 = vmul.f32 %v638, %v653
  %v684 = vmul.f32 %v645, %v653
  %v685 = vmul.f32 %v652, %v653
  %v686 = vadd.f32 %v11, %v654
  %v687 = vadd.f32 %v13, %v655
  %v688 = vadd.f32 %v15, %v656
  %v689 = vadd.f32 %v17, %v657
  %v690 = vadd.f32 %v19, %v658
  %v691 = vadd.f32 %v21, %v659
  %v692 = vadd.f32 %v23, %v660
  %v693 = vadd.f32 %v25, %v661
  %v694 = vadd.f32 %v27, %v662
  %v695 = vadd.f32 %v29, %v663
  %v696 = vadd.f32 %v31, %v664
  %v697 = vadd.f32 %v33, %v665
  %v698 = vadd.f32 %v35, %v666
  %v699 = vadd.f32 %v37, %v667
  %v700 = vadd.f32 %v39, %v668
  %v701 = vadd.f32 %v41, %v669
  %v702 = vadd.f32 %v43, %v670
  %v703 = vadd.f32 %v45, %v671
  %v704 = vadd.f32 %v47, %v672
  %v705 = vadd.f32 %v49, %v673
  %v706 = vadd.f32 %v51, %v674
  %v707 = vadd.f32 %v53, %v675
  %v708 = vadd.f32 %v55, %v676
  %v709 = vadd.f32 %v57, %v677
  %v710 = vadd.f32 %v59, %v678
  %v711 = vadd.f32 %v61, %v679
  %v712 = vadd.f32 %v63, %v680
  %v713 = vadd.f32 %v65, %v681
  %v714 = vadd.f32 %v67, %v682
  %v715 = vadd.f32 %v69, %v683
  %v716 = vadd.f32 %v71, %v684
  %v717 = vadd.f32 %v73, %v685
  %v750 = vrot.slane %v11, 6
  %v751 = vrot.slane %v12, 6
  %v752 = vsel %vm299, %v750, %v751
  %v753 = vrot.slane %v13, 6
  %v754 = vrot.slane %v14, 6
  %v755 = vsel %vm299, %v753, %v754
  %v756 = vrot.slane %v15, 6
  %v757 = vrot.slane %v16, 6
  %v758 = vsel %vm299, %v756, %v757
  %v759 = vrot.slane %v17, 6
  %v760 = vrot.slane %v18, 6
  %v761 = vsel %vm299, %v759, %v760
  %v762 = vrot.slane %v19, 6
  %v763 = vrot.slane %v20, 6
  %v764 = vsel %vm299, %v762, %v763
  %v765 = vrot.slane %v21, 6
  %v766 = vrot.slane %v22, 6
  %v767 = vsel %vm299, %v765, %v766
  %v768 = vrot.slane %v23, 6
  %v769 = vrot.slane %v24, 6
  %v770 = vsel %vm299, %v768, %v769
  %v771 = vrot.slane %v25, 6
  %v772 = vrot.slane %v26, 6
  %v773 = vsel %vm299, %v771, %v772
  %v774 = vrot.slane %v27, 6
  %v775 = vrot.slane %v28, 6
  %v776 = vsel %vm299, %v774, %v775
  %v777 = vrot.slane %v29, 6
  %v778 = vrot.slane %v30, 6
  %v779 = vsel %vm299, %v777, %v778
  %v780 = vrot.slane %v31, 6
  %v781 = vrot.slane %v32, 6
  %v782 = vsel %vm299, %v780, %v781
  %v783 = vrot.slane %v33, 6
  %v784 = vrot.slane %v34, 6
  %v785 = vsel %vm299, %v783, %v784
  %v786 = vrot.slane %v35, 6
  %v787 = vrot.slane %v36, 6
  %v788 = vsel %vm299, %v786, %v787
  %v789 = vrot.slane %v37, 6
  %v790 = vrot.slane %v38, 6
  %v791 = vsel %vm299, %v789, %v790
  %v792 = vrot.slane %v39, 6
  %v793 = vrot.slane %v40, 6
  %v794 = vsel %vm299, %v792, %v793
  %v795 = vrot.slane %v41, 6
  %v796 = vrot.slane %v42, 6
  %v797 = vsel %vm299, %v795, %v796
  %v798 = vrot.slane %v43, 6
  %v799 = vrot.slane %v44, 6
  %v800 = vsel %vm299, %v798, %v799
  %v801 = vrot.slane %v45, 6
  %v802 = vrot.slane %v46, 6
  %v803 = vsel %vm299, %v801, %v802
  %v804 = vrot.slane %v47, 6
  %v805 = vrot.slane %v48, 6
  %v806 = vsel %vm299, %v804, %v805
  %v807 = vrot.slane %v49, 6
  %v808 = vrot.slane %v50, 6
  %v809 = vsel %vm299, %v807, %v808
  %v810 = vrot.slane %v51, 6
  %v811 = vrot.slane %v52, 6
  %v812 = vsel %vm299, %v810, %v811
  %v813 = vrot.slane %v53, 6
  %v814 = vrot.slane %v54, 6
  %v815 = vsel %vm299, %v813, %v814
  %v816 = vrot.slane %v55, 6
  %v817 = vrot.slane %v56, 6
  %v818 = vsel %vm299, %v816, %v817
  %v819 = vrot.slane %v57, 6
  %v820 = vrot.slane %v58, 6
  %v821 = vsel %vm299, %v819, %v820
  %v822 = vrot.slane %v59, 6
  %v823 = vrot.slane %v60, 6
  %v824 = vsel %vm299, %v822, %v823
  %v825 = vrot.slane %v61, 6
  %v826 = vrot.slane %v62, 6
  %v827 = vsel %vm299, %v825, %v826
  %v828 = vrot.slane %v63, 6
  %v829 = vrot.slane %v64, 6
  %v830 = vsel %vm299, %v828, %v829
  %v831 = vrot.slane %v65, 6
  %v832 = vrot.slane %v66, 6
  %v833 = vsel %vm299, %v831, %v832
  %v834 = vrot.slane %v67, 6
  %v835 = vrot.slane %v68, 6
  %v836 = vsel %vm299, %v834, %v835
  %v837 = vrot.slane %v69, 6
  %v838 = vrot.slane %v70, 6
  %v839 = vsel %vm299, %v837, %v838
  %v840 = vrot.slane %v71, 6
  %v841 = vrot.slane %v72, 6
  %v842 = vsel %vm299, %v840, %v841
  %v843 = vrot.slane %v73, 6
  %v844 = vrot.slane %v74, 6
  %v845 = vsel %vm299, %v843, %v844
  %v878 = vsub.f32 %v686, %v752
  %v879 = vsub.f32 %v687, %v755
  %v880 = vsub.f32 %v688, %v758
  %v881 = vsub.f32 %v689, %v761
  %v882 = vsub.f32 %v690, %v764
  %v883 = vsub.f32 %v691, %v767
  %v884 = vsub.f32 %v692, %v770
  %v885 = vsub.f32 %v693, %v773
  %v886 = vsub.f32 %v694, %v776
  %v887 = vsub.f32 %v695, %v779
  %v888 = vsub.f32 %v696, %v782
  %v889 = vsub.f32 %v697, %v785
  %v890 = vsub.f32 %v698, %v788
  %v891 = vsub.f32 %v699, %v791
  %v892 = vsub.f32 %v700, %v794
  %v893 = vsub.f32 %v701, %v797
  %v894 = vsub.f32 %v702, %v800
  %v895 = vsub.f32 %v703, %v803
  %v896 = vsub.f32 %v704, %v806
  %v897 = vsub.f32 %v705, %v809
  %v898 = vsub.f32 %v706, %v812
  %v899 = vsub.f32 %v707, %v815
  %v900 = vsub.f32 %v708, %v818
  %v901 = vsub.f32 %v709, %v821
  %v902 = vsub.f32 %v710, %v824
  %v903 = vsub.f32 %v711, %v827
  %v904 = vsub.f32 %v712, %v830
  %v905 = vsub.f32 %v713, %v833
  %v906 = vsub.f32 %v714, %v836
  %v907 = vsub.f32 %v715, %v839
  %v908 = vsub.f32 %v716, %v842
  %v909 = vsub.f32 %v717, %v845
  %v910 = vmul.f32 %v878, %v878
  %v911 = vmul.f32 %v879, %v879
  %v912 = vmul.f32 %v880, %v880
  %v913 = vmul.f32 %v881, %v881
  %v914 = vmul.f32 %v882, %v882
  %v915 = vmul.f32 %v883, %v883
  %v916 = vmul.f32 %v884, %v884
  %v917 = vmul.f32 %v885, %v885
  %v918 = vmul.f32 %v886, %v886
  %v919 = vmul.f32 %v887, %v887
  %v920 = vmul.f32 %v888, %v888
  %v921 = vmul.f32 %v889, %v889
  %v922 = vmul.f32 %v890, %v890
  %v923 = vmul.f32 %v891, %v891
  %v924 = vmul.f32 %v892, %v892
  %v925 = vmul.f32 %v893, %v893
  %v926 = vmul.f32 %v894, %v894
  %v927 = vmul.f32 %v895, %v895
  %v928 = vmul.f32 %v896, %v896
  %v929 = vmul.f32 %v897, %v897
  %v930 = vmul.f32 %v898, %v898
  %v931 = vmul.f32 %v899, %v899
  %v932 = vmul.f32 %v900, %v900
  %v933 = vmul.f32 %v901, %v901
  %v934 = vmul.f32 %v902, %v902
  %v935 = vmul.f32 %v903, %v903
  %v936 = vmul.f32 %v904, %v904
  %v937 = vmul.f32 %v905, %v905
  %v938 = vmul.f32 %v906, %v906
  %v939 = vmul.f32 %v907, %v907
  %v940 = vmul.f32 %v908, %v908
  %v941 = vmul.f32 %v909, %v909
  %vm942 = vcmask 13312
  %v943 = vsel %vm942, %v910, 0.0
  %v944 = vsel %vm942, %v911, 0.0
  %v945 = vadd.f32 %v943, %v944
  %v946 = vsel %vm942, %v912, 0.0
  %v947 = vadd.f32 %v945, %v946
  %v948 = vsel %vm942, %v913, 0.0
  %v949 = vadd.f32 %v947, %v948
  %v950 = vsel %vm942, %v914, 0.0
  %v951 = vadd.f32 %v949, %v950
  %v952 = vsel %vm942, %v915, 0.0
  %v953 = vadd.f32 %v951, %v952
  %v954 = vsel %vm942, %v916, 0.0
  %v955 = vadd.f32 %v953, %v954
  %v956 = vsel %vm942, %v917, 0.0
  %v957 = vadd.f32 %v955, %v956
  %v958 = vsel %vm942, %v918, 0.0
  %v959 = vadd.f32 %v957, %v958
  %v960 = vsel %vm942, %v919, 0.0
  %v961 = vadd.f32 %v959, %v960
  %v962 = vsel %vm942, %v920, 0.0
  %v963 = vadd.f32 %v961, %v962
  %v964 = vsel %vm942, %v921, 0.0
  %v965 = vadd.f32 %v963, %v964
  %v966 = vsel %vm942, %v922, 0.0
  %v967 = vadd.f32 %v965, %v966
  %v968 = vsel %vm942, %v923, 0.0
  %v969 = vadd.f32 %v967, %v968
  %v970 = vsel %vm942, %v924, 0.0
  %v971 = vadd.f32 %v969, %v970
  %v972 = vsel %vm942, %v925, 0.0
  %v973 = vadd.f32 %v971, %v972
  %v974 = vsel %vm942, %v926, 0.0
  %v975 = vadd.f32 %v973, %v974
  %v976 = vsel %vm942, %v927, 0.0
  %v977 = vadd.f32 %v975, %v976
  %v978 = vsel %vm942, %v928, 0.0
  %v979 = vadd.f32 %v977, %v978
  %v980 = vsel %vm942, %v929, 0.0
  %v981 = vadd.f32 %v979, %v980
  %v982 = vsel %vm942, %v930, 0.0
  %v983 = vadd.f32 %v981, %v982
  %v984 = vsel %vm942, %v931, 0.0
  %v985 = vadd.f32 %v983, %v984
  %v986 = vsel %vm942, %v932, 0.0
  %v987 = vadd.f32 %v985, %v986
  %v988 = vsel %vm942, %v933, 0.0
  %v989 = vadd.f32 %v987, %v988
  %v990 = vsel %vm942, %v934, 0.0
  %v991 = vadd.f32 %v989, %v990
  %v992 = vsel %vm942, %v935, 0.0
  %v993 = vadd.f32 %v991, %v992
  %v994 = vsel %vm942, %v936, 0.0
  %v995 = vadd.f32 %v993, %v994
  %v996 = vsel %vm942, %v937, 0.0
  %v997 = vadd.f32 %v995, %v996
  %v998 = vsel %vm942, %v938, 0.0
  %v999 = vadd.f32 %v997, %v998
  %v1000 = vsel %vm942, %v939, 0.0
  %v1001 = vadd.f32 %v999, %v1000
  %v1002 = vsel %vm942, %v940, 0.0
  %v1003 = vadd.f32 %v1001, %v1002
  %v1004 = vsel %vm942, %v941, 0.0
  %v1005 = vadd.f32 %v1003, %v1004
  %v1006 = vadd.f32 %v1005, 1e-12
  %v1007 = vrsqrt.pop %v1006
  %v1008 = vmul.f32 %v1005, %v1007
  %v1009 = vsub.f32 0.0, %v1008
  %v1011 = vrot.slane %v1009, 3
  %v1013 = vsub.f32 %v1009, %v1011
  %v1014 = vsub.f32 1.0, %v1013
  %vm1015 = vcmp.gt.f32.partialorder %v1014, 0.0
  %v1016 = vsel %vm1015, 1, 0
  %v1017 = vcvt.s32.f32 %v1016
  %v1018 = vmul.f32 %v878, %v1007
  %v1019 = vmul.f32 %v879, %v1007
  %v1020 = vmul.f32 %v880, %v1007
  %v1021 = vmul.f32 %v881, %v1007
  %v1022 = vmul.f32 %v882, %v1007
  %v1023 = vmul.f32 %v883, %v1007
  %v1024 = vmul.f32 %v884, %v1007
  %v1025 = vmul.f32 %v885, %v1007
  %v1026 = vmul.f32 %v886, %v1007
  %v1027 = vmul.f32 %v887, %v1007
  %v1028 = vmul.f32 %v888, %v1007
  %v1029 = vmul.f32 %v889, %v1007
  %v1030 = vmul.f32 %v890, %v1007
  %v1031 = vmul.f32 %v891, %v1007
  %v1032 = vmul.f32 %v892, %v1007
  %v1033 = vmul.f32 %v893, %v1007
  %v1034 = vmul.f32 %v894, %v1007
  %v1035 = vmul.f32 %v895, %v1007
  %v1036 = vmul.f32 %v896, %v1007
  %v1037 = vmul.f32 %v897, %v1007
  %v1038 = vmul.f32 %v898, %v1007
  %v1039 = vmul.f32 %v899, %v1007
  %v1040 = vmul.f32 %v900, %v1007
  %v1041 = vmul.f32 %v901, %v1007
  %v1042 = vmul.f32 %v902, %v1007
  %v1043 = vmul.f32 %v903, %v1007
  %v1044 = vmul.f32 %v904, %v1007
  %v1045 = vmul.f32 %v905, %v1007
  %v1046 = vmul.f32 %v906, %v1007
  %v1047 = vmul.f32 %v907, %v1007
  %v1048 = vmul.f32 %v908, %v1007
  %v1049 = vmul.f32 %v909, %v1007
  %v1082 = vrot.slane %v1018, 3
  %v1083 = vrot.slane %v1019, 3
  %v1084 = vrot.slane %v1020, 3
  %v1085 = vrot.slane %v1021, 3
  %v1086 = vrot.slane %v1022, 3
  %v1087 = vrot.slane %v1023, 3
  %v1088 = vrot.slane %v1024, 3
  %v1089 = vrot.slane %v1025, 3
  %v1090 = vrot.slane %v1026, 3
  %v1091 = vrot.slane %v1027, 3
  %v1092 = vrot.slane %v1028, 3
  %v1093 = vrot.slane %v1029, 3
  %v1094 = vrot.slane %v1030, 3
  %v1095 = vrot.slane %v1031, 3
  %v1096 = vrot.slane %v1032, 3
  %v1097 = vrot.slane %v1033, 3
  %v1098 = vrot.slane %v1034, 3
  %v1099 = vrot.slane %v1035, 3
  %v1100 = vrot.slane %v1036, 3
  %v1101 = vrot.slane %v1037, 3
  %v1102 = vrot.slane %v1038, 3
  %v1103 = vrot.slane %v1039, 3
  %v1104 = vrot.slane %v1040, 3
  %v1105 = vrot.slane %v1041, 3
  %v1106 = vrot.slane %v1042, 3
  %v1107 = vrot.slane %v1043, 3
  %v1108 = vrot.slane %v1044, 3
  %v1109 = vrot.slane %v1045, 3
  %v1110 = vrot.slane %v1046, 3
  %v1111 = vrot.slane %v1047, 3
  %v1112 = vrot.slane %v1048, 3
  %v1113 = vrot.slane %v1049, 3
  %v1146 = vsub.f32 %v1018, %v1082
  %v1147 = vsub.f32 %v1019, %v1083
  %v1148 = vsub.f32 %v1020, %v1084
  %v1149 = vsub.f32 %v1021, %v1085
  %v1150 = vsub.f32 %v1022, %v1086
  %v1151 = vsub.f32 %v1023, %v1087
  %v1152 = vsub.f32 %v1024, %v1088
  %v1153 = vsub.f32 %v1025, %v1089
  %v1154 = vsub.f32 %v1026, %v1090
  %v1155 = vsub.f32 %v1027, %v1091
  %v1156 = vsub.f32 %v1028, %v1092
  %v1157 = vsub.f32 %v1029, %v1093
  %v1158 = vsub.f32 %v1030, %v1094
  %v1159 = vsub.f32 %v1031, %v1095
  %v1160 = vsub.f32 %v1032, %v1096
  %v1161 = vsub.f32 %v1033, %v1097
  %v1162 = vsub.f32 %v1034, %v1098
  %v1163 = vsub.f32 %v1035, %v1099
  %v1164 = vsub.f32 %v1036, %v1100
  %v1165 = vsub.f32 %v1037, %v1101
  %v1166 = vsub.f32 %v1038, %v1102
  %v1167 = vsub.f32 %v1039, %v1103
  %v1168 = vsub.f32 %v1040, %v1104
  %v1169 = vsub.f32 %v1041, %v1105
  %v1170 = vsub.f32 %v1042, %v1106
  %v1171 = vsub.f32 %v1043, %v1107
  %v1172 = vsub.f32 %v1044, %v1108
  %v1173 = vsub.f32 %v1045, %v1109
  %v1174 = vsub.f32 %v1046, %v1110
  %v1175 = vsub.f32 %v1047, %v1111
  %v1176 = vsub.f32 %v1048, %v1112
  %v1177 = vsub.f32 %v1049, %v1113
  %v1178 = vmul.f32 %v1017, %v1146
  %v1179 = vmul.f32 %v1017, %v1147
  %v1180 = vmul.f32 %v1017, %v1148
  %v1181 = vmul.f32 %v1017, %v1149
  %v1182 = vmul.f32 %v1017, %v1150
  %v1183 = vmul.f32 %v1017, %v1151
  %v1184 = vmul.f32 %v1017, %v1152
  %v1185 = vmul.f32 %v1017, %v1153
  %v1186 = vmul.f32 %v1017, %v1154
  %v1187 = vmul.f32 %v1017, %v1155
  %v1188 = vmul.f32 %v1017, %v1156
  %v1189 = vmul.f32 %v1017, %v1157
  %v1190 = vmul.f32 %v1017, %v1158
  %v1191 = vmul.f32 %v1017, %v1159
  %v1192 = vmul.f32 %v1017, %v1160
  %v1193 = vmul.f32 %v1017, %v1161
  %v1194 = vmul.f32 %v1017, %v1162
  %v1195 = vmul.f32 %v1017, %v1163
  %v1196 = vmul.f32 %v1017, %v1164
  %v1197 = vmul.f32 %v1017, %v1165
  %v1198 = vmul.f32 %v1017, %v1166
  %v1199 = vmul.f32 %v1017, %v1167
  %v1200 = vmul.f32 %v1017, %v1168
  %v1201 = vmul.f32 %v1017, %v1169
  %v1202 = vmul.f32 %v1017, %v1170
  %v1203 = vmul.f32 %v1017, %v1171
  %v1204 = vmul.f32 %v1017, %v1172
  %v1205 = vmul.f32 %v1017, %v1173
  %v1206 = vmul.f32 %v1017, %v1174
  %v1207 = vmul.f32 %v1017, %v1175
  %v1208 = vmul.f32 %v1017, %v1176
  %v1209 = vmul.f32 %v1017, %v1177
  %v1210 = vsel %vm428, %v1178, 0.0
  %v1211 = vrot.slane %v1210, 4
  %v1212 = vadd.f32 %v1210, %v1211
  %v1213 = vrot.slane %v1212, 2
  %v1214 = vadd.f32 %v1212, %v1213
  %v1215 = vrot.slane %v1214, 1
  %v1216 = vadd.f32 %v1214, %v1215
  %v1217 = vsel %vm428, %v1179, 0.0
  %v1218 = vrot.slane %v1217, 4
  %v1219 = vadd.f32 %v1217, %v1218
  %v1220 = vrot.slane %v1219, 2
  %v1221 = vadd.f32 %v1219, %v1220
  %v1222 = vrot.slane %v1221, 1
  %v1223 = vadd.f32 %v1221, %v1222
  %v1224 = vsel %vm428, %v1180, 0.0
  %v1225 = vrot.slane %v1224, 4
  %v1226 = vadd.f32 %v1224, %v1225
  %v1227 = vrot.slane %v1226, 2
  %v1228 = vadd.f32 %v1226, %v1227
  %v1229 = vrot.slane %v1228, 1
  %v1230 = vadd.f32 %v1228, %v1229
  %v1231 = vsel %vm428, %v1181, 0.0
  %v1232 = vrot.slane %v1231, 4
  %v1233 = vadd.f32 %v1231, %v1232
  %v1234 = vrot.slane %v1233, 2
  %v1235 = vadd.f32 %v1233, %v1234
  %v1236 = vrot.slane %v1235, 1
  %v1237 = vadd.f32 %v1235, %v1236
  %v1238 = vsel %vm428, %v1182, 0.0
  %v1239 = vrot.slane %v1238, 4
  %v1240 = vadd.f32 %v1238, %v1239
  %v1241 = vrot.slane %v1240, 2
  %v1242 = vadd.f32 %v1240, %v1241
  %v1243 = vrot.slane %v1242, 1
  %v1244 = vadd.f32 %v1242, %v1243
  %v1245 = vsel %vm428, %v1183, 0.0
  %v1246 = vrot.slane %v1245, 4
  %v1247 = vadd.f32 %v1245, %v1246
  %v1248 = vrot.slane %v1247, 2
  %v1249 = vadd.f32 %v1247, %v1248
  %v1250 = vrot.slane %v1249, 1
  %v1251 = vadd.f32 %v1249, %v1250
  %v1252 = vsel %vm428, %v1184, 0.0
  %v1253 = vrot.slane %v1252, 4
  %v1254 = vadd.f32 %v1252, %v1253
  %v1255 = vrot.slane %v1254, 2
  %v1256 = vadd.f32 %v1254, %v1255
  %v1257 = vrot.slane %v1256, 1
  %v1258 = vadd.f32 %v1256, %v1257
  %v1259 = vsel %vm428, %v1185, 0.0
  %v1260 = vrot.slane %v1259, 4
  %v1261 = vadd.f32 %v1259, %v1260
  %v1262 = vrot.slane %v1261, 2
  %v1263 = vadd.f32 %v1261, %v1262
  %v1264 = vrot.slane %v1263, 1
  %v1265 = vadd.f32 %v1263, %v1264
  %v1266 = vsel %vm428, %v1186, 0.0
  %v1267 = vrot.slane %v1266, 4
  %v1268 = vadd.f32 %v1266, %v1267
  %v1269 = vrot.slane %v1268, 2
  %v1270 = vadd.f32 %v1268, %v1269
  %v1271 = vrot.slane %v1270, 1
  %v1272 = vadd.f32 %v1270, %v1271
  %v1273 = vsel %vm428, %v1187, 0.0
  %v1274 = vrot.slane %v1273, 4
  %v1275 = vadd.f32 %v1273, %v1274
  %v1276 = vrot.slane %v1275, 2
  %v1277 = vadd.f32 %v1275, %v1276
  %v1278 = vrot.slane %v1277, 1
  %v1279 = vadd.f32 %v1277, %v1278
  %v1280 = vsel %vm428, %v1188, 0.0
  %v1281 = vrot.slane %v1280, 4
  %v1282 = vadd.f32 %v1280, %v1281
  %v1283 = vrot.slane %v1282, 2
  %v1284 = vadd.f32 %v1282, %v1283
  %v1285 = vrot.slane %v1284, 1
  %v1286 = vadd.f32 %v1284, %v1285
  %v1287 = vsel %vm428, %v1189, 0.0
  %v1288 = vrot.slane %v1287, 4
  %v1289 = vadd.f32 %v1287, %v1288
  %v1290 = vrot.slane %v1289, 2
  %v1291 = vadd.f32 %v1289, %v1290
  %v1292 = vrot.slane %v1291, 1
  %v1293 = vadd.f32 %v1291, %v1292
  %v1294 = vsel %vm428, %v1190, 0.0
  %v1295 = vrot.slane %v1294, 4
  %v1296 = vadd.f32 %v1294, %v1295
  %v1297 = vrot.slane %v1296, 2
  %v1298 = vadd.f32 %v1296, %v1297
  %v1299 = vrot.slane %v1298, 1
  %v1300 = vadd.f32 %v1298, %v1299
  %v1301 = vsel %vm428, %v1191, 0.0
  %v1302 = vrot.slane %v1301, 4
  %v1303 = vadd.f32 %v1301, %v1302
  %v1304 = vrot.slane %v1303, 2
  %v1305 = vadd.f32 %v1303, %v1304
  %v1306 = vrot.slane %v1305, 1
  %v1307 = vadd.f32 %v1305, %v1306
  %v1308 = vsel %vm428, %v1192, 0.0
  %v1309 = vrot.slane %v1308, 4
  %v1310 = vadd.f32 %v1308, %v1309
  %v1311 = vrot.slane %v1310, 2
  %v1312 = vadd.f32 %v1310, %v1311
  %v1313 = vrot.slane %v1312, 1
  %v1314 = vadd.f32 %v1312, %v1313
  %v1315 = vsel %vm428, %v1193, 0.0
  %v1316 = vrot.slane %v1315, 4
  %v1317 = vadd.f32 %v1315, %v1316
  %v1318 = vrot.slane %v1317, 2
  %v1319 = vadd.f32 %v1317, %v1318
  %v1320 = vrot.slane %v1319, 1
  %v1321 = vadd.f32 %v1319, %v1320
  %v1322 = vsel %vm428, %v1194, 0.0
  %v1323 = vrot.slane %v1322, 4
  %v1324 = vadd.f32 %v1322, %v1323
  %v1325 = vrot.slane %v1324, 2
  %v1326 = vadd.f32 %v1324, %v1325
  %v1327 = vrot.slane %v1326, 1
  %v1328 = vadd.f32 %v1326, %v1327
  %v1329 = vsel %vm428, %v1195, 0.0
  %v1330 = vrot.slane %v1329, 4
  %v1331 = vadd.f32 %v1329, %v1330
  %v1332 = vrot.slane %v1331, 2
  %v1333 = vadd.f32 %v1331, %v1332
  %v1334 = vrot.slane %v1333, 1
  %v1335 = vadd.f32 %v1333, %v1334
  %v1336 = vsel %vm428, %v1196, 0.0
  %v1337 = vrot.slane %v1336, 4
  %v1338 = vadd.f32 %v1336, %v1337
  %v1339 = vrot.slane %v1338, 2
  %v1340 = vadd.f32 %v1338, %v1339
  %v1341 = vrot.slane %v1340, 1
  %v1342 = vadd.f32 %v1340, %v1341
  %v1343 = vsel %vm428, %v1197, 0.0
  %v1344 = vrot.slane %v1343, 4
  %v1345 = vadd.f32 %v1343, %v1344
  %v1346 = vrot.slane %v1345, 2
  %v1347 = vadd.f32 %v1345, %v1346
  %v1348 = vrot.slane %v1347, 1
  %v1349 = vadd.f32 %v1347, %v1348
  %v1350 = vsel %vm428, %v1198, 0.0
  %v1351 = vrot.slane %v1350, 4
  %v1352 = vadd.f32 %v1350, %v1351
  %v1353 = vrot.slane %v1352, 2
  %v1354 = vadd.f32 %v1352, %v1353
  %v1355 = vrot.slane %v1354, 1
  %v1356 = vadd.f32 %v1354, %v1355
  %v1357 = vsel %vm428, %v1199, 0.0
  %v1358 = vrot.slane %v1357, 4
  %v1359 = vadd.f32 %v1357, %v1358
  %v1360 = vrot.slane %v1359, 2
  %v1361 = vadd.f32 %v1359, %v1360
  %v1362 = vrot.slane %v1361, 1
  %v1363 = vadd.f32 %v1361, %v1362
  %v1364 = vsel %vm428, %v1200, 0.0
  %v1365 = vrot.slane %v1364, 4
  %v1366 = vadd.f32 %v1364, %v1365
  %v1367 = vrot.slane %v1366, 2
  %v1368 = vadd.f32 %v1366, %v1367
  %v1369 = vrot.slane %v1368, 1
  %v1370 = vadd.f32 %v1368, %v1369
  %v1371 = vsel %vm428, %v1201, 0.0
  %v1372 = vrot.slane %v1371, 4
  %v1373 = vadd.f32 %v1371, %v1372
  %v1374 = vrot.slane %v1373, 2
  %v1375 = vadd.f32 %v1373, %v1374
  %v1376 = vrot.slane %v1375, 1
  %v1377 = vadd.f32 %v1375, %v1376
  %v1378 = vsel %vm428, %v1202, 0.0
  %v1379 = vrot.slane %v1378, 4
  %v1380 = vadd.f32 %v1378, %v1379
  %v1381 = vrot.slane %v1380, 2
  %v1382 = vadd.f32 %v1380, %v1381
  %v1383 = vrot.slane %v1382, 1
  %v1384 = vadd.f32 %v1382, %v1383
  %v1385 = vsel %vm428, %v1203, 0.0
  %v1386 = vrot.slane %v1385, 4
  %v1387 = vadd.f32 %v1385, %v1386
  %v1388 = vrot.slane %v1387, 2
  %v1389 = vadd.f32 %v1387, %v1388
  %v1390 = vrot.slane %v1389, 1
  %v1391 = vadd.f32 %v1389, %v1390
  %v1392 = vsel %vm428, %v1204, 0.0
  %v1393 = vrot.slane %v1392, 4
  %v1394 = vadd.f32 %v1392, %v1393
  %v1395 = vrot.slane %v1394, 2
  %v1396 = vadd.f32 %v1394, %v1395
  %v1397 = vrot.slane %v1396, 1
  %v1398 = vadd.f32 %v1396, %v1397
  %v1399 = vsel %vm428, %v1205, 0.0
  %v1400 = vrot.slane %v1399, 4
  %v1401 = vadd.f32 %v1399, %v1400
  %v1402 = vrot.slane %v1401, 2
  %v1403 = vadd.f32 %v1401, %v1402
  %v1404 = vrot.slane %v1403, 1
  %v1405 = vadd.f32 %v1403, %v1404
  %v1406 = vsel %vm428, %v1206, 0.0
  %v1407 = vrot.slane %v1406, 4
  %v1408 = vadd.f32 %v1406, %v1407
  %v1409 = vrot.slane %v1408, 2
  %v1410 = vadd.f32 %v1408, %v1409
  %v1411 = vrot.slane %v1410, 1
  %v1412 = vadd.f32 %v1410, %v1411
  %v1413 = vsel %vm428, %v1207, 0.0
  %v1414 = vrot.slane %v1413, 4
  %v1415 = vadd.f32 %v1413, %v1414
  %v1416 = vrot.slane %v1415, 2
  %v1417 = vadd.f32 %v1415, %v1416
  %v1418 = vrot.slane %v1417, 1
  %v1419 = vadd.f32 %v1417, %v1418
  %v1420 = vsel %vm428, %v1208, 0.0
  %v1421 = vrot.slane %v1420, 4
  %v1422 = vadd.f32 %v1420, %v1421
  %v1423 = vrot.slane %v1422, 2
  %v1424 = vadd.f32 %v1422, %v1423
  %v1425 = vrot.slane %v1424, 1
  %v1426 = vadd.f32 %v1424, %v1425
  %v1427 = vsel %vm428, %v1209, 0.0
  %v1428 = vrot.slane %v1427, 4
  %v1429 = vadd.f32 %v1427, %v1428
  %v1430 = vrot.slane %v1429, 2
  %v1431 = vadd.f32 %v1429, %v1430
  %v1432 = vrot.slane %v1431, 1
  %v1433 = vadd.f32 %v1431, %v1432
  %v1434 = vmul.f32 %v1216, 0.16666667
  %v1435 = vmul.f32 %v1223, 0.16666667
  %v1436 = vmul.f32 %v1230, 0.16666667
  %v1437 = vmul.f32 %v1237, 0.16666667
  %v1438 = vmul.f32 %v1244, 0.16666667
  %v1439 = vmul.f32 %v1251, 0.16666667
  %v1440 = vmul.f32 %v1258, 0.16666667
  %v1441 = vmul.f32 %v1265, 0.16666667
  %v1442 = vmul.f32 %v1272, 0.16666667
  %v1443 = vmul.f32 %v1279, 0.16666667
  %v1444 = vmul.f32 %v1286, 0.16666667
  %v1445 = vmul.f32 %v1293, 0.16666667
  %v1446 = vmul.f32 %v1300, 0.16666667
  %v1447 = vmul.f32 %v1307, 0.16666667
  %v1448 = vmul.f32 %v1314, 0.16666667
  %v1449 = vmul.f32 %v1321, 0.16666667
  %v1450 = vmul.f32 %v1328, 0.16666667
  %v1451 = vmul.f32 %v1335, 0.16666667
  %v1452 = vmul.f32 %v1342, 0.16666667
  %v1453 = vmul.f32 %v1349, 0.16666667
  %v1454 = vmul.f32 %v1356, 0.16666667
  %v1455 = vmul.f32 %v1363, 0.16666667
  %v1456 = vmul.f32 %v1370, 0.16666667
  %v1457 = vmul.f32 %v1377, 0.16666667
  %v1458 = vmul.f32 %v1384, 0.16666667
  %v1459 = vmul.f32 %v1391, 0.16666667
  %v1460 = vmul.f32 %v1398, 0.16666667
  %v1461 = vmul.f32 %v1405, 0.16666667
  %v1462 = vmul.f32 %v1412, 0.16666667
  %v1463 = vmul.f32 %v1419, 0.16666667
  %v1464 = vmul.f32 %v1426, 0.16666667
  %v1465 = vmul.f32 %v1433, 0.16666667
  %v1466 = vmul.f32 %v1434, 0.1
  %v1467 = vmul.f32 %v1435, 0.1
  %v1468 = vmul.f32 %v1436, 0.1
  %v1469 = vmul.f32 %v1437, 0.1
  %v1470 = vmul.f32 %v1438, 0.1
  %v1471 = vmul.f32 %v1439, 0.1
  %v1472 = vmul.f32 %v1440, 0.1
  %v1473 = vmul.f32 %v1441, 0.1
  %v1474 = vmul.f32 %v1442, 0.1
  %v1475 = vmul.f32 %v1443, 0.1
  %v1476 = vmul.f32 %v1444, 0.1
  %v1477 = vmul.f32 %v1445, 0.1
  %v1478 = vmul.f32 %v1446, 0.1
  %v1479 = vmul.f32 %v1447, 0.1
  %v1480 = vmul.f32 %v1448, 0.1
  %v1481 = vmul.f32 %v1449, 0.1
  %v1482 = vmul.f32 %v1450, 0.1
  %v1483 = vmul.f32 %v1451, 0.1
  %v1484 = vmul.f32 %v1452, 0.1
  %v1485 = vmul.f32 %v1453, 0.1
  %v1486 = vmul.f32 %v1454, 0.1
  %v1487 = vmul.f32 %v1455, 0.1
  %v1488 = vmul.f32 %v1456, 0.1
  %v1489 = vmul.f32 %v1457, 0.1
  %v1490 = vmul.f32 %v1458, 0.1
  %v1491 = vmul.f32 %v1459, 0.1
  %v1492 = vmul.f32 %v1460, 0.1
  %v1493 = vmul.f32 %v1461, 0.1
  %v1494 = vmul.f32 %v1462, 0.1
  %v1495 = vmul.f32 %v1463, 0.1
  %v1496 = vmul.f32 %v1464, 0.1
  %v1497 = vmul.f32 %v1465, 0.1
  %v1498 = vsub.f32 %v654, %v1466
  %v1499 = vsub.f32 %v655, %v1467
  %v1500 = vsub.f32 %v656, %v1468
  %v1501 = vsub.f32 %v657, %v1469
  %v1502 = vsub.f32 %v658, %v1470
  %v1503 = vsub.f32 %v659, %v1471
  %v1504 = vsub.f32 %v660, %v1472
  %v1505 = vsub.f32 %v661, %v1473
  %v1506 = vsub.f32 %v662, %v1474
  %v1507 = vsub.f32 %v663, %v1475
  %v1508 = vsub.f32 %v664, %v1476
  %v1509 = vsub.f32 %v665, %v1477
  %v1510 = vsub.f32 %v666, %v1478
  %v1511 = vsub.f32 %v667, %v1479
  %v1512 = vsub.f32 %v668, %v1480
  %v1513 = vsub.f32 %v669, %v1481
  %v1514 = vsub.f32 %v670, %v1482
  %v1515 = vsub.f32 %v671, %v1483
  %v1516 = vsub.f32 %v672, %v1484
  %v1517 = vsub.f32 %v673, %v1485
  %v1518 = vsub.f32 %v674, %v1486
  %v1519 = vsub.f32 %v675, %v1487
  %v1520 = vsub.f32 %v676, %v1488
  %v1521 = vsub.f32 %v677, %v1489
  %v1522 = vsub.f32 %v678, %v1490
  %v1523 = vsub.f32 %v679, %v1491
  %v1524 = vsub.f32 %v680, %v1492
  %v1525 = vsub.f32 %v681, %v1493
  %v1526 = vsub.f32 %v682, %v1494
  %v1527 = vsub.f32 %v683, %v1495
  %v1528 = vsub.f32 %v684, %v1496
  %v1529 = vsub.f32 %v685, %v1497
  %v1530 = vld [vmem:[%s1] sm:$0xff]
  %v1531 = vld [vmem:[%s1 + $0x8] sm:$0xff]
  %v1532 = vld [vmem:[%s1 + $0x10] sm:$0xff]
  %v1533 = vld [vmem:[%s1 + $0x18] sm:$0xff]
  %v1534 = vld [vmem:[%s1 + $0x20] sm:$0xff]
  %v1535 = vld [vmem:[%s1 + $0x28] sm:$0xff]
  %v1536 = vld [vmem:[%s1 + $0x30] sm:$0xff]
  %v1537 = vld [vmem:[%s1 + $0x38] sm:$0xff]
  %v1538 = vld [vmem:[%s1 + $0x40] sm:$0xff]
  %v1539 = vld [vmem:[%s1 + $0x48] sm:$0xff]
  %v1540 = vld [vmem:[%s1 + $0x50] sm:$0xff]
  %v1541 = vld [vmem:[%s1 + $0x58] sm:$0xff]
  %v1542 = vld [vmem:[%s1 + $0x60] sm:$0xff]
  %v1543 = vld [vmem:[%s1 + $0x68] sm:$0xff]
  %v1544 = vld [vmem:[%s1 + $0x70] sm:$0xff]
  %v1545 = vld [vmem:[%s1 + $0x78] sm:$0xff]
  %v1546 = vld [vmem:[%s1 + $0x80] sm:$0xff]
  %v1547 = vld [vmem:[%s1 + $0x88] sm:$0xff]
  %v1548 = vld [vmem:[%s1 + $0x90] sm:$0xff]
  %v1549 = vld [vmem:[%s1 + $0x98] sm:$0xff]
  %v1550 = vld [vmem:[%s1 + $0xa0] sm:$0xff]
  %v1551 = vld [vmem:[%s1 + $0xa8] sm:$0xff]
  %v1552 = vld [vmem:[%s1 + $0xb0] sm:$0xff]
  %v1553 = vld [vmem:[%s1 + $0xb8] sm:$0xff]
  %v1554 = vld [vmem:[%s1 + $0xc0] sm:$0xff]
  %v1555 = vld [vmem:[%s1 + $0xc8] sm:$0xff]
  %v1556 = vld [vmem:[%s1 + $0xd0] sm:$0xff]
  %v1557 = vld [vmem:[%s1 + $0xd8] sm:$0xff]
  %v1558 = vld [vmem:[%s1 + $0xe0] sm:$0xff]
  %v1559 = vld [vmem:[%s1 + $0xe8] sm:$0xff]
  %v1560 = vld [vmem:[%s1 + $0xf0] sm:$0xff]
  %v1561 = vld [vmem:[%s1 + $0xf8] sm:$0xff]
  %v1562 = vld [vmem:[%s1 + $0x100] sm:$0xff]
  %v1563 = vld [vmem:[%s1 + $0x108] sm:$0xff]
  %v1564 = vld [vmem:[%s1 + $0x110] sm:$0xff]
  %v1565 = vld [vmem:[%s1 + $0x118] sm:$0xff]
  %v1566 = vld [vmem:[%s1 + $0x120] sm:$0xff]
  %v1567 = vld [vmem:[%s1 + $0x128] sm:$0xff]
  %v1568 = vld [vmem:[%s1 + $0x130] sm:$0xff]
  %v1569 = vld [vmem:[%s1 + $0x138] sm:$0xff]
  %v1570 = vld [vmem:[%s1 + $0x140] sm:$0xff]
  %v1571 = vld [vmem:[%s1 + $0x148] sm:$0xff]
  %v1572 = vld [vmem:[%s1 + $0x150] sm:$0xff]
  %v1573 = vld [vmem:[%s1 + $0x158] sm:$0xff]
  %v1574 = vld [vmem:[%s1 + $0x160] sm:$0xff]
  %v1575 = vld [vmem:[%s1 + $0x168] sm:$0xff]
  %v1576 = vld [vmem:[%s1 + $0x170] sm:$0xff]
  %v1577 = vld [vmem:[%s1 + $0x178] sm:$0xff]
  %v1578 = vld [vmem:[%s1 + $0x180] sm:$0xff]
  %v1579 = vld [vmem:[%s1 + $0x188] sm:$0xff]
  %v1580 = vld [vmem:[%s1 + $0x190] sm:$0xff]
  %v1581 = vld [vmem:[%s1 + $0x198] sm:$0xff]
  %v1582 = vld [vmem:[%s1 + $0x1a0] sm:$0xff]
  %v1583 = vld [vmem:[%s1 + $0x1a8] sm:$0xff]
  %v1584 = vld [vmem:[%s1 + $0x1b0] sm:$0xff]
  %v1585 = vld [vmem:[%s1 + $0x1b8] sm:$0xff]
  %v1586 = vld [vmem:[%s1 + $0x1c0] sm:$0xff]
  %v1587 = vld [vmem:[%s1 + $0x1c8] sm:$0xff]
  %v1588 = vld [vmem:[%s1 + $0x1d0] sm:$0xff]
  %v1589 = vld [vmem:[%s1 + $0x1d8] sm:$0xff]
  %v1590 = vld [vmem:[%s1 + $0x1e0] sm:$0xff]
  %v1591 = vld [vmem:[%s1 + $0x1e8] sm:$0xff]
  %v1592 = vld [vmem:[%s1 + $0x1f0] sm:$0xff]
  %v1593 = vld [vmem:[%s1 + $0x1f8] sm:$0xff]
  %v1594 = vadd.f32 %v1530, %v1498
  %v1595 = vadd.f32 %v1532, %v1499
  %v1596 = vadd.f32 %v1534, %v1500
  %v1597 = vadd.f32 %v1536, %v1501
  %v1598 = vadd.f32 %v1538, %v1502
  %v1599 = vadd.f32 %v1540, %v1503
  %v1600 = vadd.f32 %v1542, %v1504
  %v1601 = vadd.f32 %v1544, %v1505
  %v1602 = vadd.f32 %v1546, %v1506
  %v1603 = vadd.f32 %v1548, %v1507
  %v1604 = vadd.f32 %v1550, %v1508
  %v1605 = vadd.f32 %v1552, %v1509
  %v1606 = vadd.f32 %v1554, %v1510
  %v1607 = vadd.f32 %v1556, %v1511
  %v1608 = vadd.f32 %v1558, %v1512
  %v1609 = vadd.f32 %v1560, %v1513
  %v1610 = vadd.f32 %v1562, %v1514
  %v1611 = vadd.f32 %v1564, %v1515
  %v1612 = vadd.f32 %v1566, %v1516
  %v1613 = vadd.f32 %v1568, %v1517
  %v1614 = vadd.f32 %v1570, %v1518
  %v1615 = vadd.f32 %v1572, %v1519
  %v1616 = vadd.f32 %v1574, %v1520
  %v1617 = vadd.f32 %v1576, %v1521
  %v1618 = vadd.f32 %v1578, %v1522
  %v1619 = vadd.f32 %v1580, %v1523
  %v1620 = vadd.f32 %v1582, %v1524
  %v1621 = vadd.f32 %v1584, %v1525
  %v1622 = vadd.f32 %v1586, %v1526
  %v1623 = vadd.f32 %v1588, %v1527
  %v1624 = vadd.f32 %v1590, %v1528
  %v1625 = vadd.f32 %v1592, %v1529
  %v1626 = vsub.f32 %v1594, %v1531
  %v1627 = vsub.f32 %v1595, %v1533
  %v1628 = vsub.f32 %v1596, %v1535
  %v1629 = vsub.f32 %v1597, %v1537
  %v1630 = vsub.f32 %v1598, %v1539
  %v1631 = vsub.f32 %v1599, %v1541
  %v1632 = vsub.f32 %v1600, %v1543
  %v1633 = vsub.f32 %v1601, %v1545
  %v1634 = vsub.f32 %v1602, %v1547
  %v1635 = vsub.f32 %v1603, %v1549
  %v1636 = vsub.f32 %v1604, %v1551
  %v1637 = vsub.f32 %v1605, %v1553
  %v1638 = vsub.f32 %v1606, %v1555
  %v1639 = vsub.f32 %v1607, %v1557
  %v1640 = vsub.f32 %v1608, %v1559
  %v1641 = vsub.f32 %v1609, %v1561
  %v1642 = vsub.f32 %v1610, %v1563
  %v1643 = vsub.f32 %v1611, %v1565
  %v1644 = vsub.f32 %v1612, %v1567
  %v1645 = vsub.f32 %v1613, %v1569
  %v1646 = vsub.f32 %v1614, %v1571
  %v1647 = vsub.f32 %v1615, %v1573
  %v1648 = vsub.f32 %v1616, %v1575
  %v1649 = vsub.f32 %v1617, %v1577
  %v1650 = vsub.f32 %v1618, %v1579
  %v1651 = vsub.f32 %v1619, %v1581
  %v1652 = vsub.f32 %v1620, %v1583
  %v1653 = vsub.f32 %v1621, %v1585
  %v1654 = vsub.f32 %v1622, %v1587
  %v1655 = vsub.f32 %v1623, %v1589
  %v1656 = vsub.f32 %v1624, %v1591
  %v1657 = vsub.f32 %v1625, %v1593
  %v1658 = vmul.f32 %v1626, %v1626
  %v1659 = vmul.f32 %v1627, %v1627
  %v1660 = vmul.f32 %v1628, %v1628
  %v1661 = vmul.f32 %v1629, %v1629
  %v1662 = vmul.f32 %v1630, %v1630
  %v1663 = vmul.f32 %v1631, %v1631
  %v1664 = vmul.f32 %v1632, %v1632
  %v1665 = vmul.f32 %v1633, %v1633
  %v1666 = vmul.f32 %v1634, %v1634
  %v1667 = vmul.f32 %v1635, %v1635
  %v1668 = vmul.f32 %v1636, %v1636
  %v1669 = vmul.f32 %v1637, %v1637
  %v1670 = vmul.f32 %v1638, %v1638
  %v1671 = vmul.f32 %v1639, %v1639
  %v1672 = vmul.f32 %v1640, %v1640
  %v1673 = vmul.f32 %v1641, %v1641
  %v1674 = vmul.f32 %v1642, %v1642
  %v1675 = vmul.f32 %v1643, %v1643
  %v1676 = vmul.f32 %v1644, %v1644
  %v1677 = vmul.f32 %v1645, %v1645
  %v1678 = vmul.f32 %v1646, %v1646
  %v1679 = vmul.f32 %v1647, %v1647
  %v1680 = vmul.f32 %v1648, %v1648
  %v1681 = vmul.f32 %v1649, %v1649
  %v1682 = vmul.f32 %v1650, %v1650
  %v1683 = vmul.f32 %v1651, %v1651
  %v1684 = vmul.f32 %v1652, %v1652
  %v1685 = vmul.f32 %v1653, %v1653
  %v1686 = vmul.f32 %v1654, %v1654
  %v1687 = vmul.f32 %v1655, %v1655
  %v1688 = vmul.f32 %v1656, %v1656
  %v1689 = vmul.f32 %v1657, %v1657
  %vm1690 = vcmask 15360
  %v1691 = vsel %vm1690, %v1658, 0.0
  %v1692 = vsel %vm1690, %v1659, 0.0
  %v1693 = vadd.f32 %v1691, %v1692
  %v1694 = vsel %vm1690, %v1660, 0.0
  %v1695 = vadd.f32 %v1693, %v1694
  %v1696 = vsel %vm1690, %v1661, 0.0
  %v1697 = vadd.f32 %v1695, %v1696
  %v1698 = vsel %vm1690, %v1662, 0.0
  %v1699 = vadd.f32 %v1697, %v1698
  %v1700 = vsel %vm1690, %v1663, 0.0
  %v1701 = vadd.f32 %v1699, %v1700
  %v1702 = vsel %vm1690, %v1664, 0.0
  %v1703 = vadd.f32 %v1701, %v1702
  %v1704 = vsel %vm1690, %v1665, 0.0
  %v1705 = vadd.f32 %v1703, %v1704
  %v1706 = vsel %vm1690, %v1666, 0.0
  %v1707 = vadd.f32 %v1705, %v1706
  %v1708 = vsel %vm1690, %v1667, 0.0
  %v1709 = vadd.f32 %v1707, %v1708
  %v1710 = vsel %vm1690, %v1668, 0.0
  %v1711 = vadd.f32 %v1709, %v1710
  %v1712 = vsel %vm1690, %v1669, 0.0
  %v1713 = vadd.f32 %v1711, %v1712
  %v1714 = vsel %vm1690, %v1670, 0.0
  %v1715 = vadd.f32 %v1713, %v1714
  %v1716 = vsel %vm1690, %v1671, 0.0
  %v1717 = vadd.f32 %v1715, %v1716
  %v1718 = vsel %vm1690, %v1672, 0.0
  %v1719 = vadd.f32 %v1717, %v1718
  %v1720 = vsel %vm1690, %v1673, 0.0
  %v1721 = vadd.f32 %v1719, %v1720
  %v1722 = vsel %vm1690, %v1674, 0.0
  %v1723 = vadd.f32 %v1721, %v1722
  %v1724 = vsel %vm1690, %v1675, 0.0
  %v1725 = vadd.f32 %v1723, %v1724
  %v1726 = vsel %vm1690, %v1676, 0.0
  %v1727 = vadd.f32 %v1725, %v1726
  %v1728 = vsel %vm1690, %v1677, 0.0
  %v1729 = vadd.f32 %v1727, %v1728
  %v1730 = vsel %vm1690, %v1678, 0.0
  %v1731 = vadd.f32 %v1729, %v1730
  %v1732 = vsel %vm1690, %v1679, 0.0
  %v1733 = vadd.f32 %v1731, %v1732
  %v1734 = vsel %vm1690, %v1680, 0.0
  %v1735 = vadd.f32 %v1733, %v1734
  %v1736 = vsel %vm1690, %v1681, 0.0
  %v1737 = vadd.f32 %v1735, %v1736
  %v1738 = vsel %vm1690, %v1682, 0.0
  %v1739 = vadd.f32 %v1737, %v1738
  %v1740 = vsel %vm1690, %v1683, 0.0
  %v1741 = vadd.f32 %v1739, %v1740
  %v1742 = vsel %vm1690, %v1684, 0.0
  %v1743 = vadd.f32 %v1741, %v1742
  %v1744 = vsel %vm1690, %v1685, 0.0
  %v1745 = vadd.f32 %v1743, %v1744
  %v1746 = vsel %vm1690, %v1686, 0.0
  %v1747 = vadd.f32 %v1745, %v1746
  %v1748 = vsel %vm1690, %v1687, 0.0
  %v1749 = vadd.f32 %v1747, %v1748
  %v1750 = vsel %vm1690, %v1688, 0.0
  %v1751 = vadd.f32 %v1749, %v1750
  %v1752 = vsel %vm1690, %v1689, 0.0
  %v1753 = vadd.f32 %v1751, %v1752
  %v1754 = vadd.f32 %v1753, 1e-12
  %v1755 = vrsqrt.pop %v1754
  %v1756 = vmul.f32 %v1753, %v1755
  %v1757 = vsub.f32 0.0, %v1756
  %1758 = vst.msk [vmem:[%s2] sm:$0xff] %vm1690, %v1757
  // Predicated region
  $region10: #{tpu_custom_call.1} parent=0 // pred_check
    _
  $region11: #{tpu_custom_call.1} parent=0 // pred_check_branch
    %1760 = sbr.rel (0) target = $region13
  $region12: #{tpu_custom_call.1} parent=0 // pred_region
    _
  $region13: #{tpu_custom_call.1} parent=0 // pred_fallthru
    _
  // Predicated region
  $region14: #{tpu_custom_call.1} parent=0 // pred_check
    _
  $region15: #{tpu_custom_call.1} parent=0 // pred_check_branch
    %1762 = sbr.rel (0) target = $region17
  $region16: #{tpu_custom_call.1} parent=0 // pred_region
    _
  $region17: #{tpu_custom_call.1} parent=0 // pred_fallthru
    _

</llo_original>
